<compile_context>
chip_gen: v7x
topology: tpu7x:2x2x1
jax: 0.10.0
libtpu: 0.0.40
codegen_flags: <defaults>
</compile_context>

<pallas_src>
import functools
import math

import jax
import jax.numpy as jnp
from jax import lax
from jax.experimental import pallas as pl
from jax.experimental.pallas import tpu as pltpu


# ---------------------------------------------------------------------------
# Kernels
# ---------------------------------------------------------------------------
def _kv_kernel_sr(x_ref, wsr_ref, bsr_ref, g_ref, beta_ref, wkv_ref, bkv_ref,
                  kT_ref, v_ref, *, eps):
    """Strided conv (as per-kh matmuls) + LayerNorm + fused K/V projection.

    x_ref   : (1, THr, sr, Wr, sr*C)  raw activations for THr reduced rows
    wsr_ref : (sr, sr*C, C)           HWIO conv weight, flattened per kh
    wkv_ref : (C, 2C)                 [wk | wv]
    kT_ref  : (1, C, THr*Wr)          K emitted pre-transposed (bf16)
    v_ref   : (1, THr*Wr, C)          V (bf16)
    """
    _, THr, sr, Wr, srC = x_ref.shape
    C = srC // sr
    Np = THr * Wr

    acc = jnp.zeros((Np, C), jnp.float32)
    for kh in range(sr):                                   # static unroll, sr <= 8
        # Major-dim slice of the ref (free), then a major->sublane merge reshape.
        xh = x_ref[0, :, kh, :, :]                         # (THr, Wr, sr*C) f32
        xp = xh.reshape(Np, srC).astype(jnp.bfloat16)      # (Np, sr*C)
        acc = acc + jnp.dot(xp, wsr_ref[kh],
                            preferred_element_type=jnp.float32)
    red = acc + bsr_ref[...]                               # conv bias

    # LayerNorm over channels (f32).
    mu = jnp.mean(red, axis=-1, keepdims=True)
    var = jnp.mean(jnp.square(red - mu), axis=-1, keepdims=True)
    red = (red - mu) * lax.rsqrt(var + eps)
    red = red * g_ref[...] + beta_ref[...]
    red_b = red.astype(jnp.bfloat16)

    # Fused K|V projection: one (Np, C) @ (C, 2C) matmul.
    kv = jnp.dot(red_b, wkv_ref[...],
                 preferred_element_type=jnp.float32) + bkv_ref[...]
    kT_ref[0] = kv[:, :C].T.astype(kT_ref.dtype)           # (C, Np)
    v_ref[0] = kv[:, C:].astype(v_ref.dtype)               # (Np, C)


def _kv_kernel_nosr(x_ref, wkv_ref, bkv_ref, kT_ref, v_ref):
    """Fused K/V projection when sr_ratio == 1 (no reduction / no LayerNorm)."""
    C = wkv_ref.shape[0]
    xb = x_ref[0].astype(jnp.bfloat16)                     # (TK, C)
    kv = jnp.dot(xb, wkv_ref[...],
                 preferred_element_type=jnp.float32) + bkv_ref[...]
    kT_ref[0] = kv[:, :C].T.astype(kT_ref.dtype)
    v_ref[0] = kv[:, C:].astype(v_ref.dtype)


def _attn_kernel(x_ref, wq_ref, bq_ref, kT_ref, v_ref, o_ref, acc_ref, *,
                 num_heads, use_bf16_exp):
    """Q projection + multi-head attention for one (batch, query-row) tile.

    The 1/sqrt(hd) scale is pre-folded into wq/bq by the wrapper.
    """
    x = x_ref[0].astype(jnp.bfloat16)                      # (TQ, C)
    q = (jnp.dot(x, wq_ref[...], preferred_element_type=jnp.float32)
         + bq_ref[...]).astype(jnp.bfloat16)               # (TQ, C), one wide cast
    kT = kT_ref[0]                                         # (C, Nr)  bf16
    v = v_ref[0]                                           # (Nr, C)  bf16
    C = q.shape[-1]
    hd = C // num_heads

    for h in range(num_heads):                             # static unroll
        lo = h * hd
        s = jnp.dot(q[:, lo:lo + hd], kT[lo:lo + hd, :],
                    preferred_element_type=jnp.float32)    # (TQ, Nr), already scaled
        m = jnp.max(s, axis=-1, keepdims=True)
        z = s - m
        if use_bf16_exp:                                   # v6e/v7x: bf16 EUP
            e = jnp.exp(z.astype(jnp.bfloat16))
        else:                                              # v5e and older: f32 exp
            e = jnp.exp(z).astype(jnp.bfloat16)
        denom = jnp.sum(e.astype(jnp.float32), axis=-1, keepdims=True)
        # Deferred normalization: scale the (TQ, hd) context, not the (TQ, Nr) probs.
        ctx = jnp.dot(e, v[:, lo:lo + hd],
                      preferred_element_type=jnp.float32)  # (TQ, hd)
        # TODO(synk): attention-prob dropout is identity in eval mode; omitted.
        acc_ref[:, lo:lo + hd] = ctx * pl.reciprocal(denom, approx=True)

    o_ref[0] = acc_ref[...].astype(o_ref.dtype)            # single lane-dense store


# ---------------------------------------------------------------------------
# Wrapper helpers
# ---------------------------------------------------------------------------
def _device_kind():
    try:
        return jax.devices()[0].device_kind.lower()
    except Exception:
        return ""


def _vmem_limit_bytes():
    kind = _device_kind()
    if "v7" in kind or "tpu7" in kind:
        return 48 * 1024 * 1024      # v7x: 64 MiB physical, leave headroom
    if "v5" in kind or "v6" in kind:
        return 100 * 1024 * 1024     # v5e/v6e: 128 MiB physical
    return 64 * 1024 * 1024


def _use_bf16_exp():
    kind = _device_kind()
    # v5e and older have no bf16 EUP; keep the exponent in f32 there.
    return not any(t in kind for t in ("v2", "v3", "v4", "v5"))


def _pick_tile(n, align, max_tile):
    """Largest multiple of `align` <= max_tile that divides n, else n (full)."""
    best = 0
    t = align
    while t <= min(n, max_tile):
        if n % t == 0:
            best = t
        t += align
    return best if best else n


def _pick_hr_tile(Hr, Wr, max_rows=512):
    """Largest THr dividing Hr with THr*Wr lane-aligned (%128) and <= max_rows."""
    best = None
    for THr in range(1, Hr + 1):
        if Hr % THr:
            continue
        TNr = THr * Wr
        if TNr > max_rows:
            break
        if TNr % 128 == 0:
            best = THr
    return best if best is not None else Hr   # fallback: one full tile per batch


# ---------------------------------------------------------------------------
# Wrapper
# ---------------------------------------------------------------------------
def segformer_efficient_self_attention(hidden_states, params, height, width,
                                        num_heads, sr_ratio):
    """hidden_states: (B, N, C) with N == height * width (row-major over H, W)."""
    B, N, C = hidden_states.shape
    assert N == height * width
    assert C % num_heads == 0
    hd = C // num_heads
    scale = 1.0 / math.sqrt(hd)
    bf16 = jnp.bfloat16

    vmem_limit = _vmem_limit_bytes()
    use_bf16_exp = _use_bf16_exp()

    # Fused K|V weights (single matmul in the KV kernel).
    wkv = jnp.concatenate([params["wk"], params["wv"]], axis=1).astype(bf16)  # (C, 2C)
    bkv = jnp.concatenate([params["bk"], params["bv"]]).reshape(1, 2 * C)

    # ---------------- K / V (optionally spatially reduced) ----------------
    if sr_ratio > 1:
        sr = sr_ratio
        assert height % sr == 0 and width % sr == 0, \
            "sequence_reduction_ratio must divide height and width"
        Hr, Wr = height // sr, width // sr
        Nr = Hr * Wr
        srC = sr * C
        # Pure contiguous reshape (bitcast in XLA) -- no extra HBM pass.
        x5 = hidden_states.reshape(B, Hr, sr, Wr, srC)
        # HWIO (sr, sr, C, C) -> per-kh (kw*C + ci, co), matches kernel's lane order.
        w_sr = params["w_sr"].reshape(sr, srC, C).astype(bf16)
        b_sr = params["b_sr"].reshape(1, C)
        ln_g = params["ln_g"].reshape(1, C)
        ln_b = params["ln_b"].reshape(1, C)

        THr = _pick_hr_tile(Hr, Wr)
        TNr = THr * Wr

        kT, v = pl.pallas_call(
            functools.partial(_kv_kernel_sr, eps=1e-5),
            out_shape=(jax.ShapeDtypeStruct((B, C, Nr), bf16),   # K pre-transposed
                       jax.ShapeDtypeStruct((B, Nr, C), bf16)),
            grid_spec=pltpu.PrefetchScalarGridSpec(
                num_scalar_prefetch=0,
                grid=(B, Hr // THr),
                in_specs=[
                    pl.BlockSpec((1, THr, sr, Wr, srC),
                                 lambda b, t: (b, t, 0, 0, 0)),
                    pl.BlockSpec((sr, srC, C), lambda b, t: (0, 0, 0)),
                    pl.BlockSpec((1, C), lambda b, t: (0, 0)),
                    pl.BlockSpec((1, C), lambda b, t: (0, 0)),
                    pl.BlockSpec((1, C), lambda b, t: (0, 0)),
                    pl.BlockSpec((C, 2 * C), lambda b, t: (0, 0)),
                    pl.BlockSpec((1, 2 * C), lambda b, t: (0, 0)),
                ],
                out_specs=(pl.BlockSpec((1, C, TNr), lambda b, t: (b, 0, t)),
                           pl.BlockSpec((1, TNr, C), lambda b, t: (b, t, 0))),
            ),
            compiler_params=pltpu.CompilerParams(
                dimension_semantics=("parallel", "parallel"),
                vmem_limit_bytes=vmem_limit),
        )(x5, w_sr, b_sr, ln_g, ln_b, wkv, bkv)
        Nr_eff = Nr
    else:
        Nr_eff = N
        # TK must be a multiple of 128 (last dim of the transposed-K block) or N.
        TK = _pick_tile(N, align=128, max_tile=512)
        kT, v = pl.pallas_call(
            _kv_kernel_nosr,
            out_shape=(jax.ShapeDtypeStruct((B, C, N), bf16),
                       jax.ShapeDtypeStruct((B, N, C), bf16)),
            grid_spec=pltpu.PrefetchScalarGridSpec(
                num_scalar_prefetch=0,
                grid=(B, N // TK),
                in_specs=[
                    pl.BlockSpec((1, TK, C), lambda b, t: (b, t, 0)),
                    pl.BlockSpec((C, 2 * C), lambda b, t: (0, 0)),
                    pl.BlockSpec((1, 2 * C), lambda b, t: (0, 0)),
                ],
                out_specs=(pl.BlockSpec((1, C, TK), lambda b, t: (b, 0, t)),
                           pl.BlockSpec((1, TK, C), lambda b, t: (b, t, 0))),
            ),
            compiler_params=pltpu.CompilerParams(
                dimension_semantics=("parallel", "parallel"),
                vmem_limit_bytes=vmem_limit),
        )(hidden_states, wkv, bkv)

    # ---------------- Q projection + attention, tiled over query rows ------
    TQ = _pick_tile(N, align=8, max_tile=512)
    # Fold the 1/sqrt(hd) scale into the query projection.
    wq = (params["wq"] * scale).astype(bf16)
    bq = (params["bq"] * scale).reshape(1, C)

    out = pl.pallas_call(
        functools.partial(_attn_kernel, num_heads=num_heads,
                          use_bf16_exp=use_bf16_exp),
        out_shape=jax.ShapeDtypeStruct((B, N, C), hidden_states.dtype),
        grid_spec=pltpu.PrefetchScalarGridSpec(
            num_scalar_prefetch=0,
            grid=(B, N // TQ),
            in_specs=[
                pl.BlockSpec((1, TQ, C), lambda b, t: (b, t, 0)),
                pl.BlockSpec((C, C), lambda b, t: (0, 0)),
                pl.BlockSpec((1, C), lambda b, t: (0, 0)),
                pl.BlockSpec((1, C, Nr_eff), lambda b, t: (b, 0, 0)),
                pl.BlockSpec((1, Nr_eff, C), lambda b, t: (b, 0, 0)),
            ],
            out_specs=pl.BlockSpec((1, TQ, C), lambda b, t: (b, t, 0)),
            scratch_shapes=[pltpu.VMEM((TQ, C), jnp.float32)],
        ),
        compiler_params=pltpu.CompilerParams(
            dimension_semantics=("parallel", "parallel"),
            vmem_limit_bytes=vmem_limit),
    )(hidden_states, wq, bq, kT, v)
    return out


# ---------------------------------------------------------------------------
# Pure-JAX reference (mirrors the PyTorch forward, dropout in eval mode)
# ---------------------------------------------------------------------------
def reference_attention(hidden, params, height, width, num_heads, sr_ratio):
    B, N, C = hidden.shape
    hd = C // num_heads

    def to_heads(x):
        b, n, _ = x.shape
        return x.reshape(b, n, num_heads, hd).transpose(0, 2, 1, 3)

    q = to_heads(hidden @ params["wq"] + params["bq"])
    kv_in = hidden
    if sr_ratio > 1:
        img = hidden.reshape(B, height, width, C)
        red = lax.conv_general_dilated(
            img, params["w_sr"], window_strides=(sr_ratio, sr_ratio),
            padding="VALID", dimension_numbers=("NHWC", "HWIO", "NHWC"))
        red = (red + params["b_sr"]).reshape(B, -1, C)
        mu = jnp.mean(red, axis=-1, keepdims=True)
        var = jnp.mean(jnp.square(red - mu), axis=-1, keepdims=True)
        kv_in = (red - mu) * lax.rsqrt(var + 1e-5) * params["ln_g"] + params["ln_b"]
    k = to_heads(kv_in @ params["wk"] + params["bk"])
    v = to_heads(kv_in @ params["wv"] + params["bv"])
    s = jnp.einsum("bhqd,bhkd->bhqk", q, k) / math.sqrt(hd)
    p = jax.nn.softmax(s, axis=-1)
    ctx = jnp.einsum("bhqk,bhkd->bhqd", p, v)
    return ctx.transpose(0, 2, 1, 3).reshape(B, N, C)


def make_params(key, hidden_size, sr_ratio):
    C = hidden_size
    ks = jax.random.split(key, 10)
    s = 1.0 / math.sqrt(C)

    def lin(kw, kb):
        return (jax.random.uniform(kw, (C, C), jnp.float32, -s, s),
                jax.random.uniform(kb, (C,), jnp.float32, -s, s))

    wq, bq = lin(ks[0], ks[1])
    wk, bk = lin(ks[2], ks[3])
    wv, bv = lin(ks[4], ks[5])
    p = {"wq": wq, "bq": bq, "wk": wk, "bk": bk, "wv": wv, "bv": bv}
    if sr_ratio > 1:
        sc = 1.0 / math.sqrt(C * sr_ratio * sr_ratio)
        p["w_sr"] = jax.random.uniform(
            ks[6], (sr_ratio, sr_ratio, C, C), jnp.float32, -sc, sc)  # HWIO
        p["b_sr"] = jax.random.uniform(ks[7], (C,), jnp.float32, -sc, sc)
        p["ln_g"] = 1.0 + 0.1 * jax.random.normal(ks[8], (C,), jnp.float32)
        p["ln_b"] = 0.1 * jax.random.normal(ks[9], (C,), jnp.float32)
    return p


if __name__ == "__main__":
    key = jax.random.PRNGKey(0)
    kx, kp, kx2, kp2 = jax.random.split(key, 4)

    # --- sr_ratio > 1 path (conv reduction + LayerNorm fused in KV kernel) ---
    B, H, W = 2, 16, 16
    hidden_size, num_heads, sr_ratio = 64, 2, 2
    N = H * W
    x = jax.random.normal(kx, (B, N, hidden_size), jnp.float32)
    params = make_params(kp, hidden_size, sr_ratio)

    out = segformer_efficient_self_attention(x, params, H, W, num_heads, sr_ratio)
    out = jax.block_until_ready(out)
    ref = reference_attention(x, params, H, W, num_heads, sr_ratio)
    assert out.shape == (B, N, hidden_size)
    err = float(jnp.max(jnp.abs(out - ref)))
    assert jnp.allclose(out, ref, atol=2e-2, rtol=2e-2), err

    # --- sr_ratio == 1 path ---
    H2 = W2 = 8
    N2 = H2 * W2
    x2 = jax.random.normal(kx2, (B, N2, hidden_size), jnp.float32)
    params2 = make_params(kp2, hidden_size, 1)

    out2 = segformer_efficient_self_attention(x2, params2, H2, W2, num_heads, 1)
    out2 = jax.block_until_ready(out2)
    ref2 = reference_attention(x2, params2, H2, W2, num_heads, 1)
    err2 = float(jnp.max(jnp.abs(out2 - ref2)))
    assert jnp.allclose(out2, ref2, atol=2e-2, rtol=2e-2), err2

    print("KERNEL_OK")
</pallas_src>

<mosaic_0001>
module attributes {stable_mosaic.version = 11 : i64} {
  func.func @_kv_kernel_sr(%arg0: i32, %arg1: i32, %arg2: memref<1x8x2x8x128xf32, #tpu.memory_space<vmem>>, %arg3: memref<2x128x64xbf16, #tpu.memory_space<vmem>>, %arg4: memref<1x64xf32, #tpu.memory_space<vmem>>, %arg5: memref<1x64xf32, #tpu.memory_space<vmem>>, %arg6: memref<1x64xf32, #tpu.memory_space<vmem>>, %arg7: memref<64x128xbf16, #tpu.memory_space<vmem>>, %arg8: memref<1x128xf32, #tpu.memory_space<vmem>>, %arg9: memref<1x64x64xbf16, #tpu.memory_space<vmem>>, %arg10: memref<1x64x64xbf16, #tpu.memory_space<vmem>>) attributes {dimension_semantics = [#tpu.dimension_semantics<parallel>, #tpu.dimension_semantics<parallel>], iteration_bounds = array<i64: 2, 1>, scalar_prefetch = 0 : i64, scratch_operands = 0 : i64, tpu.core_type = #tpu.core_type<tc>, window_params = [{transform_indices = @transform_0, window_bounds = array<i64: 1, 8, 2, 8, 128>}, {pipeline_mode = #tpu.pipeline_mode<synchronous>, transform_indices = @transform_1, window_bounds = array<i64: 2, 128, 64>}, {pipeline_mode = #tpu.pipeline_mode<synchronous>, transform_indices = @transform_2, window_bounds = array<i64: 1, 64>}, {pipeline_mode = #tpu.pipeline_mode<synchronous>, transform_indices = @transform_3, window_bounds = array<i64: 1, 64>}, {pipeline_mode = #tpu.pipeline_mode<synchronous>, transform_indices = @transform_4, window_bounds = array<i64: 1, 64>}, {pipeline_mode = #tpu.pipeline_mode<synchronous>, transform_indices = @transform_5, window_bounds = array<i64: 64, 128>}, {pipeline_mode = #tpu.pipeline_mode<synchronous>, transform_indices = @transform_6, window_bounds = array<i64: 1, 128>}, {transform_indices = @transform_7, window_bounds = array<i64: 1, 64, 64>}, {transform_indices = @transform_8, window_bounds = array<i64: 1, 64, 64>}]} {
    %cst = arith.constant 0.000000e+00 : f32
    %0 = vector.broadcast %cst : f32 to vector<64x64xf32>
    %c0 = arith.constant 0 : index
    %c0_0 = arith.constant 0 : index
    %c0_1 = arith.constant 0 : index
    %c0_2 = arith.constant 0 : index
    %c0_3 = arith.constant 0 : index
    %1 = vector.load %arg2[%c0, %c0_0, %c0_1, %c0_2, %c0_3] : memref<1x8x2x8x128xf32, #tpu.memory_space<vmem>>, vector<1x8x1x8x128xf32>
    %2 = vector.shape_cast %1 : vector<1x8x1x8x128xf32> to vector<8x8x128xf32>
    %3 = vector.shape_cast %2 : vector<8x8x128xf32> to vector<64x128xf32>
    %4 = arith.truncf %3 : vector<64x128xf32> to vector<64x128xbf16>
    %c0_4 = arith.constant 0 : index
    %c0_5 = arith.constant 0 : index
    %c0_6 = arith.constant 0 : index
    %5 = vector.load %arg3[%c0_4, %c0_5, %c0_6] : memref<2x128x64xbf16, #tpu.memory_space<vmem>>, vector<1x128x64xbf16>
    %6 = vector.shape_cast %5 : vector<1x128x64xbf16> to vector<128x64xbf16>
    %cst_7 = arith.constant dense<0.000000e+00> : vector<64x64xf32>
    %7 = tpu.matmul %4, %6, %cst_7 {dimension_numbers = #tpu.dot_dimension_numbers<[1], [0], [0], [1], [0, 0, 1, 1], [], []>} : vector<64x128xbf16>, vector<128x64xbf16>, vector<64x64xf32> -> vector<64x64xf32>
    %8 = arith.addf %0, %7 : vector<64x64xf32>
    %c0_8 = arith.constant 0 : index
    %c0_9 = arith.constant 0 : index
    %c1 = arith.constant 1 : index
    %c0_10 = arith.constant 0 : index
    %c0_11 = arith.constant 0 : index
    %9 = vector.load %arg2[%c0_8, %c0_9, %c1, %c0_10, %c0_11] : memref<1x8x2x8x128xf32, #tpu.memory_space<vmem>>, vector<1x8x1x8x128xf32>
    %10 = vector.shape_cast %9 : vector<1x8x1x8x128xf32> to vector<8x8x128xf32>
    %11 = vector.shape_cast %10 : vector<8x8x128xf32> to vector<64x128xf32>
    %12 = arith.truncf %11 : vector<64x128xf32> to vector<64x128xbf16>
    %c1_12 = arith.constant 1 : index
    %c0_13 = arith.constant 0 : index
    %c0_14 = arith.constant 0 : index
    %13 = vector.load %arg3[%c1_12, %c0_13, %c0_14] : memref<2x128x64xbf16, #tpu.memory_space<vmem>>, vector<1x128x64xbf16>
    %14 = vector.shape_cast %13 : vector<1x128x64xbf16> to vector<128x64xbf16>
    %cst_15 = arith.constant dense<0.000000e+00> : vector<64x64xf32>
    %15 = tpu.matmul %12, %14, %cst_15 {dimension_numbers = #tpu.dot_dimension_numbers<[1], [0], [0], [1], [0, 0, 1, 1], [], []>} : vector<64x128xbf16>, vector<128x64xbf16>, vector<64x64xf32> -> vector<64x64xf32>
    %16 = arith.addf %8, %15 : vector<64x64xf32>
    %c0_16 = arith.constant 0 : index
    %c0_17 = arith.constant 0 : index
    %17 = vector.load %arg4[%c0_16, %c0_17] : memref<1x64xf32, #tpu.memory_space<vmem>>, vector<1x64xf32>
    %18 = vector.broadcast %17 : vector<1x64xf32> to vector<64x64xf32>
    %19 = arith.addf %16, %18 : vector<64x64xf32>
    %cst_18 = arith.constant dense<0.000000e+00> : vector<64xf32>
    %20 = vector.multi_reduction <add>, %19, %cst_18 [1] : vector<64x64xf32> to vector<64xf32>
    %21 = vector.shape_cast %20 : vector<64xf32> to vector<64x1xf32>
    %cst_19 = arith.constant 6.400000e+01 : f32
    %22 = vector.broadcast %cst_19 : f32 to vector<64x1xf32>
    %23 = arith.divf %21, %22 : vector<64x1xf32>
    %24 = vector.broadcast %23 : vector<64x1xf32> to vector<64x64xf32>
    %25 = arith.subf %19, %24 : vector<64x64xf32>
    %26 = arith.mulf %25, %25 : vector<64x64xf32>
    %cst_20 = arith.constant dense<0.000000e+00> : vector<64xf32>
    %27 = vector.multi_reduction <add>, %26, %cst_20 [1] : vector<64x64xf32> to vector<64xf32>
    %28 = vector.shape_cast %27 : vector<64xf32> to vector<64x1xf32>
    %cst_21 = arith.constant 6.400000e+01 : f32
    %29 = vector.broadcast %cst_21 : f32 to vector<64x1xf32>
    %30 = arith.divf %28, %29 : vector<64x1xf32>
    %31 = vector.broadcast %23 : vector<64x1xf32> to vector<64x64xf32>
    %32 = arith.subf %19, %31 : vector<64x64xf32>
    %cst_22 = arith.constant 9.99999974E-6 : f32
    %33 = vector.broadcast %cst_22 : f32 to vector<64x1xf32>
    %34 = arith.addf %30, %33 : vector<64x1xf32>
    %35 = math.rsqrt %34 : vector<64x1xf32>
    %36 = vector.broadcast %35 : vector<64x1xf32> to vector<64x64xf32>
    %37 = arith.mulf %32, %36 : vector<64x64xf32>
    %c0_23 = arith.constant 0 : index
    %c0_24 = arith.constant 0 : index
    %38 = vector.load %arg5[%c0_23, %c0_24] : memref<1x64xf32, #tpu.memory_space<vmem>>, vector<1x64xf32>
    %39 = vector.broadcast %38 : vector<1x64xf32> to vector<64x64xf32>
    %40 = arith.mulf %37, %39 : vector<64x64xf32>
    %c0_25 = arith.constant 0 : index
    %c0_26 = arith.constant 0 : index
    %41 = vector.load %arg6[%c0_25, %c0_26] : memref<1x64xf32, #tpu.memory_space<vmem>>, vector<1x64xf32>
    %42 = vector.broadcast %41 : vector<1x64xf32> to vector<64x64xf32>
    %43 = arith.addf %40, %42 : vector<64x64xf32>
    %44 = arith.truncf %43 : vector<64x64xf32> to vector<64x64xbf16>
    %c0_27 = arith.constant 0 : index
    %c0_28 = arith.constant 0 : index
    %45 = vector.load %arg7[%c0_27, %c0_28] : memref<64x128xbf16, #tpu.memory_space<vmem>>, vector<64x128xbf16>
    %cst_29 = arith.constant dense<0.000000e+00> : vector<64x128xf32>
    %46 = tpu.matmul %44, %45, %cst_29 {dimension_numbers = #tpu.dot_dimension_numbers<[1], [0], [0], [1], [0, 0, 1, 1], [], []>} : vector<64x64xbf16>, vector<64x128xbf16>, vector<64x128xf32> -> vector<64x128xf32>
    %c0_30 = arith.constant 0 : index
    %c0_31 = arith.constant 0 : index
    %47 = vector.load %arg8[%c0_30, %c0_31] : memref<1x128xf32, #tpu.memory_space<vmem>>, vector<1x128xf32>
    %48 = vector.broadcast %47 : vector<1x128xf32> to vector<64x128xf32>
    %49 = arith.addf %46, %48 : vector<64x128xf32>
    %50 = vector.extract_strided_slice %49 {offsets = [0, 0], sizes = [64, 64], strides = [1, 1]} : vector<64x128xf32> to vector<64x64xf32>
    %51 = tpu.transpose %50, [1, 0] : vector<64x64xf32> -> vector<64x64xf32>
    %52 = arith.truncf %51 : vector<64x64xf32> to vector<64x64xbf16>
    %c0_32 = arith.constant 0 : index
    %c0_33 = arith.constant 0 : index
    %c0_34 = arith.constant 0 : index
    %53 = vector.load %arg9[%c0_32, %c0_33, %c0_34] : memref<1x64x64xbf16, #tpu.memory_space<vmem>>, vector<1x64x64xbf16>
    %54 = vector.shape_cast %53 : vector<1x64x64xbf16> to vector<64x64xbf16>
    %55 = vector.shape_cast %52 : vector<64x64xbf16> to vector<1x64x64xbf16>
    tpu.vector_store %arg9[%c0_32, %c0_33, %c0_34], %55 {strides = array<i32>} : memref<1x64x64xbf16, #tpu.memory_space<vmem>>, vector<1x64x64xbf16>,
    %56 = vector.extract_strided_slice %49 {offsets = [0, 64], sizes = [64, 64], strides = [1, 1]} : vector<64x128xf32> to vector<64x64xf32>
    %57 = arith.truncf %56 : vector<64x64xf32> to vector<64x64xbf16>
    %c0_35 = arith.constant 0 : index
    %c0_36 = arith.constant 0 : index
    %c0_37 = arith.constant 0 : index
    %58 = vector.load %arg10[%c0_35, %c0_36, %c0_37] : memref<1x64x64xbf16, #tpu.memory_space<vmem>>, vector<1x64x64xbf16>
    %59 = vector.shape_cast %58 : vector<1x64x64xbf16> to vector<64x64xbf16>
    %60 = vector.shape_cast %57 : vector<64x64xbf16> to vector<1x64x64xbf16>
    tpu.vector_store %arg10[%c0_35, %c0_36, %c0_37], %60 {strides = array<i32>} : memref<1x64x64xbf16, #tpu.memory_space<vmem>>, vector<1x64x64xbf16>,
    return
  }
  func.func @transform_0(%arg0: i32, %arg1: i32) -> (i32, i32, i32, i32, i32) {
    %c0_i32 = arith.constant 0 : i32
    %c0_i32_0 = arith.constant 0 : i32
    %c0_i32_1 = arith.constant 0 : i32
    %c0_i32_2 = arith.constant 0 : i32
    return %arg0, %arg1, %c0_i32, %c0_i32_0, %c0_i32_1 : i32, i32, i32, i32, i32
  }
  func.func @transform_1(%arg0: i32, %arg1: i32) -> (i32, i32, i32) {
    %c0_i32 = arith.constant 0 : i32
    %c0_i32_0 = arith.constant 0 : i32
    %c0_i32_1 = arith.constant 0 : i32
    %c0_i32_2 = arith.constant 0 : i32
    return %c0_i32, %c0_i32_0, %c0_i32_1 : i32, i32, i32
  }
  func.func @transform_2(%arg0: i32, %arg1: i32) -> (i32, i32) {
    %c0_i32 = arith.constant 0 : i32
    %c0_i32_0 = arith.constant 0 : i32
    %c0_i32_1 = arith.constant 0 : i32
    return %c0_i32, %c0_i32_0 : i32, i32
  }
  func.func @transform_3(%arg0: i32, %arg1: i32) -> (i32, i32) {
    %c0_i32 = arith.constant 0 : i32
    %c0_i32_0 = arith.constant 0 : i32
    %c0_i32_1 = arith.constant 0 : i32
    return %c0_i32, %c0_i32_0 : i32, i32
  }
  func.func @transform_4(%arg0: i32, %arg1: i32) -> (i32, i32) {
    %c0_i32 = arith.constant 0 : i32
    %c0_i32_0 = arith.constant 0 : i32
    %c0_i32_1 = arith.constant 0 : i32
    return %c0_i32, %c0_i32_0 : i32, i32
  }
  func.func @transform_5(%arg0: i32, %arg1: i32) -> (i32, i32) {
    %c0_i32 = arith.constant 0 : i32
    %c0_i32_0 = arith.constant 0 : i32
    %c0_i32_1 = arith.constant 0 : i32
    return %c0_i32, %c0_i32_0 : i32, i32
  }
  func.func @transform_6(%arg0: i32, %arg1: i32) -> (i32, i32) {
    %c0_i32 = arith.constant 0 : i32
    %c0_i32_0 = arith.constant 0 : i32
    %c0_i32_1 = arith.constant 0 : i32
    return %c0_i32, %c0_i32_0 : i32, i32
  }
  func.func @transform_7(%arg0: i32, %arg1: i32) -> (i32, i32, i32) {
    %c0_i32 = arith.constant 0 : i32
    %c0_i32_0 = arith.constant 0 : i32
    return %arg0, %c0_i32, %arg1 : i32, i32, i32
  }
  func.func @transform_8(%arg0: i32, %arg1: i32) -> (i32, i32, i32) {
    %c0_i32 = arith.constant 0 : i32
    %c0_i32_0 = arith.constant 0 : i32
    return %arg0, %arg1, %c0_i32 : i32, i32, i32
  }
}

</mosaic_0001>

<llo_original>
// kernel: tpu_custom_call.1
$region0: #{tpu_custom_call.1}
  #allocation0 [shape = 'u32[]', space=smem, size = 0x4, offset = 0x4, fixed_abs, tag = 'smem constant byte address 0x4 - core index']
  #allocation1 [shape = 'u32[144,128]{1,0:T(1,128)}', space=vmem, size = 0x12000, scoped, tag = 'internal scratch']
  %s0 = inlined_call_operand.hbm [shape: f32[2,8,2,8,128], index: 0, kind: input, shape index: {}]
  %s1 = inlined_call_operand.hbm [shape: bf16[2,128,64], index: 1, kind: input, shape index: {}]
  %s2 = inlined_call_operand.hbm [shape: f32[1,64], index: 2, kind: input, shape index: {}]
  %s3 = inlined_call_operand.hbm [shape: f32[1,64], index: 3, kind: input, shape index: {}]
  %s4 = inlined_call_operand.hbm [shape: f32[1,64], index: 4, kind: input, shape index: {}]
  %s5 = inlined_call_operand.hbm [shape: bf16[64,128], index: 5, kind: input, shape index: {}]
  %s6 = inlined_call_operand.hbm [shape: f32[1,128], index: 6, kind: input, shape index: {}]
  %s7 = inlined_call_operand.hbm [shape: bf16[2,64,64], index: 7, kind: output, shape index: {0}]
  %s8 = inlined_call_operand.hbm [shape: bf16[2,64,64], index: 8, kind: output, shape index: {1}]
  %9 = xla_tuple %s7, %s8
  %s10 = sld [smem:[#allocation0]]
  $region97: #{tpu_custom_call.1} parent=0
    _
  %s12 = ssub.s32 1, %s10
  %s13 = scalar_select 0, %s12, %s10
  $region1: #{tpu_custom_call.1} parent=0
    #allocation2 [shape = 'u8[131072]{0}', space=vmem, size = 0x20000, scoped, tag = 'input window, operand 0']
    #allocation3 [shape = 's32[2]{0}', space=sflag, size = 0x8, scoped, tag = 'scoped memory for tpu_custom_call.1']
    #allocation4 [shape = 's32[2]{0}', space=sflag, size = 0x8, scoped, tag = 'scoped memory for tpu_custom_call.1']
    #allocation5 [shape = 'u8[65536]{0}', space=vmem, size = 0x10000, scoped, tag = 'input window, operand 1, single buffered']
    #allocation6 [shape = 's32[1]{0}', space=sflag, size = 0x4, scoped, tag = 'scoped memory for tpu_custom_call.1']
    #allocation7 [shape = 'u8[512]{0}', space=vmem, size = 0x400, scoped, tag = 'input window, operand 2, single buffered']
    #allocation8 [shape = 'u8[512]{0}', space=vmem, size = 0x400, scoped, tag = 'input window, operand 3, single buffered']
    #allocation9 [shape = 's32[1]{0}', space=sflag, size = 0x4, scoped, tag = 'scoped memory for tpu_custom_call.1']
    #allocation10 [shape = 'u8[512]{0}', space=vmem, size = 0x400, scoped, tag = 'input window, operand 4, single buffered']
    #allocation11 [shape = 'u8[16384]{0}', space=vmem, size = 0x4000, scoped, tag = 'input window, operand 5, single buffered']
    #allocation12 [shape = 's32[1]{0}', space=sflag, size = 0x4, scoped, tag = 'scoped memory for tpu_custom_call.1']
    #allocation13 [shape = 'u8[512]{0}', space=vmem, size = 0x400, scoped, tag = 'input window, operand 6, single buffered']
    #allocation14 [shape = 'u8[32768]{0}', space=vmem, size = 0x8000, scoped, tag = 'output window, operand 0']
    #allocation15 [shape = 'u8[32768]{0}', space=vmem, size = 0x8000, scoped, tag = 'output window, operand 1']
    #allocation16 [shape = 's32[2]{0}', space=sflag, size = 0x8, scoped, tag = 'scoped memory for tpu_custom_call.1']
    %14 = vsyncpa [#allocation3], 0
    %s15 = scalar_lea.sflag [#allocation3], 1
    %16 = vsyncpa %s15, 0
    %17 = vsyncpa [#allocation6], 0
    %18 = vsyncpa [#allocation9], 0
    %19 = vsyncpa [#allocation12], 0
    %20 = vsyncpa [#allocation4], 0
    %s21 = scalar_lea.sflag [#allocation4], 1
    %22 = vsyncpa %s21, 0
    %23 = vsyncpa [#allocation16], 0
    %s24 = scalar_lea.sflag [#allocation16], 1
    %25 = vsyncpa %s24, 0
    loop: start=0, step=1, limit=4
    $region2: #{tpu_custom_call.1} parent=1 // loop_pre_header
      _
    $region3: #{tpu_custom_call.1} parent=1 // loop_header
      %s27 = sphi 0, %s31
      %p28 = scmp.ge.s32.totalorder %s27, 4
      %s34 = sphi 0, %s46
      %s35 = sphi 0, %s42
      %s36 = sphi 0, %s34
      %s37 = sphi 0, %s35
      %s38 = sphi 0, %s36
      %s39 = sphi 0, %s37
      %s51 = sphi 0, %s53
      %s54 = sphi 0, %s51
      %s55 = sphi 0, %s54
      %s71 = sphi 0, %s55
      %s75 = sphi 0, %s75
      %s77 = sphi 0, %s75
      %s78 = sphi 0, %s77
      %s92 = sphi 0, %s78
      %s96 = sphi 0, %s96
      %s98 = sphi 0, %s96
      %s99 = sphi 0, %s98
      %s113 = sphi 0, %s99
      %s117 = sphi 0, %s117
      %s119 = sphi 0, %s117
      %s120 = sphi 0, %s119
      %s134 = sphi 0, %s120
      %s138 = sphi 0, %s138
      %s140 = sphi 0, %s138
      %s141 = sphi 0, %s140
      %s155 = sphi 0, %s141
      %s159 = sphi 0, %s159
      %s161 = sphi 0, %s159
      %s162 = sphi 0, %s161
      %s176 = sphi 0, %s162
      %s180 = sphi 0, %s180
      %s182 = sphi 0, %s180
      %s183 = sphi 0, %s182
      %s197 = sphi 0, %s183
      %s205 = sphi 0, %s207
      %s208 = sphi 0, %s205
      %s209 = sphi 0, %s208
      %s225 = sphi 0, %s209
      %s233 = sphi 0, %s235
      %s236 = sphi 0, %s233
      %s237 = sphi 0, %s236
      %s253 = sphi 0, %s237
    $region4: #{tpu_custom_call.1} parent=1 // loop_header_branch
      %30 = sbr.rel (%p28) target = $region8
    $region5: #{tpu_custom_call.1} parent=1 // loop_body
      %s32 = ssub.s32 %s27, 1
      %s33 = ssub.s32 %s27, 2
      %s40 = sadd.s32 1, %s35
      %p41 = scmp.ge.s32.totalorder %s40, 1
      %s42 = scalar_select %p41, 0, %s40
      %s43 = sadd.s32 1, %s34
      %s44 = scalar_select %p41, %s43, %s34
      %p45 = scmp.ge.s32.totalorder %s44, 2
      %s46 = scalar_select %p45, 0, %s44
      %s47 = ssub.s32 %s34, %s46
      %s48 = ssub.s32 %s35, %s42
      %s49 = sor.u32 %s47, %s48
      %p50 = scmp.eq.s32.totalorder %s49, 0
      %s52 = sadd.s32 %s51, 1
      %s53 = scalar_select %p50, %s51, %s52
      %p56 = pneg %p50
      %p57 = scmp.eq.s32.totalorder %s27, 1
      %p58 = por %p56, %p57
      %p59 = scmp.ne.s32.totalorder %s51, %s54
      %p60 = scmp.eq.s32.totalorder %s27, 0
      %p61 = por %p59, %p60
      %p62 = scmp.ne.s32.totalorder %s51, %s54
      %p63 = scmp.eq.s32.totalorder %s32, 1
      %p64 = por %p62, %p63
      %p65 = scmp.ne.s32.totalorder %s54, %s55
      %p66 = scmp.eq.s32.totalorder %s32, 0
      %p67 = por %p65, %p66
      %p68 = scmp.ne.s32.totalorder %s54, %s55
      %p69 = scmp.eq.s32.totalorder %s33, 1
      %p70 = por %p68, %p69
      %p72 = scmp.ne.s32.totalorder %s55, %s71
      %p73 = scmp.eq.s32.totalorder %s33, 0
      %p74 = por %p72, %p73
      %s76 = sadd.s32 %s75, 1
      %p79 = scmp.eq.s32.totalorder %s27, 1
      %p80 = scmp.ne.s32.totalorder %s75, %s77
      %p81 = scmp.eq.s32.totalorder %s27, 0
      %p82 = por %p80, %p81
      %p83 = scmp.ne.s32.totalorder %s75, %s77
      %p84 = scmp.eq.s32.totalorder %s32, 1
      %p85 = por %p83, %p84
      %p86 = scmp.ne.s32.totalorder %s77, %s78
      %p87 = scmp.eq.s32.totalorder %s32, 0
      %p88 = por %p86, %p87
      %p89 = scmp.ne.s32.totalorder %s77, %s78
      %p90 = scmp.eq.s32.totalorder %s33, 1
      %p91 = por %p89, %p90
      %p93 = scmp.ne.s32.totalorder %s78, %s92
      %p94 = scmp.eq.s32.totalorder %s33, 0
      %p95 = por %p93, %p94
      %s97 = sadd.s32 %s96, 1
      %p100 = scmp.eq.s32.totalorder %s27, 1
      %p101 = scmp.ne.s32.totalorder %s96, %s98
      %p102 = scmp.eq.s32.totalorder %s27, 0
      %p103 = por %p101, %p102
      %p104 = scmp.ne.s32.totalorder %s96, %s98
      %p105 = scmp.eq.s32.totalorder %s32, 1
      %p106 = por %p104, %p105
      %p107 = scmp.ne.s32.totalorder %s98, %s99
      %p108 = scmp.eq.s32.totalorder %s32, 0
      %p109 = por %p107, %p108
      %p110 = scmp.ne.s32.totalorder %s98, %s99
      %p111 = scmp.eq.s32.totalorder %s33, 1
      %p112 = por %p110, %p111
      %p114 = scmp.ne.s32.totalorder %s99, %s113
      %p115 = scmp.eq.s32.totalorder %s33, 0
      %p116 = por %p114, %p115
      %s118 = sadd.s32 %s117, 1
      %p121 = scmp.eq.s32.totalorder %s27, 1
      %p122 = scmp.ne.s32.totalorder %s117, %s119
      %p123 = scmp.eq.s32.totalorder %s27, 0
      %p124 = por %p122, %p123
      %p125 = scmp.ne.s32.totalorder %s117, %s119
      %p126 = scmp.eq.s32.totalorder %s32, 1
      %p127 = por %p125, %p126
      %p128 = scmp.ne.s32.totalorder %s119, %s120
      %p129 = scmp.eq.s32.totalorder %s32, 0
      %p130 = por %p128, %p129
      %p131 = scmp.ne.s32.totalorder %s119, %s120
      %p132 = scmp.eq.s32.totalorder %s33, 1
      %p133 = por %p131, %p132
      %p135 = scmp.ne.s32.totalorder %s120, %s134
      %p136 = scmp.eq.s32.totalorder %s33, 0
      %p137 = por %p135, %p136
      %s139 = sadd.s32 %s138, 1
      %p142 = scmp.eq.s32.totalorder %s27, 1
      %p143 = scmp.ne.s32.totalorder %s138, %s140
      %p144 = scmp.eq.s32.totalorder %s27, 0
      %p145 = por %p143, %p144
      %p146 = scmp.ne.s32.totalorder %s138, %s140
      %p147 = scmp.eq.s32.totalorder %s32, 1
      %p148 = por %p146, %p147
      %p149 = scmp.ne.s32.totalorder %s140, %s141
      %p150 = scmp.eq.s32.totalorder %s32, 0
      %p151 = por %p149, %p150
      %p152 = scmp.ne.s32.totalorder %s140, %s141
      %p153 = scmp.eq.s32.totalorder %s33, 1
      %p154 = por %p152, %p153
      %p156 = scmp.ne.s32.totalorder %s141, %s155
      %p157 = scmp.eq.s32.totalorder %s33, 0
      %p158 = por %p156, %p157
      %s160 = sadd.s32 %s159, 1
      %p163 = scmp.eq.s32.totalorder %s27, 1
      %p164 = scmp.ne.s32.totalorder %s159, %s161
      %p165 = scmp.eq.s32.totalorder %s27, 0
      %p166 = por %p164, %p165
      %p167 = scmp.ne.s32.totalorder %s159, %s161
      %p168 = scmp.eq.s32.totalorder %s32, 1
      %p169 = por %p167, %p168
      %p170 = scmp.ne.s32.totalorder %s161, %s162
      %p171 = scmp.eq.s32.totalorder %s32, 0
      %p172 = por %p170, %p171
      %p173 = scmp.ne.s32.totalorder %s161, %s162
      %p174 = scmp.eq.s32.totalorder %s33, 1
      %p175 = por %p173, %p174
      %p177 = scmp.ne.s32.totalorder %s162, %s176
      %p178 = scmp.eq.s32.totalorder %s33, 0
      %p179 = por %p177, %p178
      %s181 = sadd.s32 %s180, 1
      %p184 = scmp.eq.s32.totalorder %s27, 1
      %p185 = scmp.ne.s32.totalorder %s180, %s182
      %p186 = scmp.eq.s32.totalorder %s27, 0
      %p187 = por %p185, %p186
      %p188 = scmp.ne.s32.totalorder %s180, %s182
      %p189 = scmp.eq.s32.totalorder %s32, 1
      %p190 = por %p188, %p189
      %p191 = scmp.ne.s32.totalorder %s182, %s183
      %p192 = scmp.eq.s32.totalorder %s32, 0
      %p193 = por %p191, %p192
      %p194 = scmp.ne.s32.totalorder %s182, %s183
      %p195 = scmp.eq.s32.totalorder %s33, 1
      %p196 = por %p194, %p195
      %p198 = scmp.ne.s32.totalorder %s183, %s197
      %p199 = scmp.eq.s32.totalorder %s33, 0
      %p200 = por %p198, %p199
      %s201 = ssub.s32 %s34, %s46
      %s202 = ssub.s32 %s35, %s42
      %s203 = sor.u32 %s201, %s202
      %p204 = scmp.eq.s32.totalorder %s203, 0
      %s206 = sadd.s32 %s205, 1
      %s207 = scalar_select %p204, %s205, %s206
      %p210 = pneg %p204
      %p211 = scmp.eq.s32.totalorder %s27, 1
      %p212 = por %p210, %p211
      %p213 = scmp.ne.s32.totalorder %s205, %s208
      %p214 = scmp.eq.s32.totalorder %s27, 0
      %p215 = por %p213, %p214
      %p216 = scmp.ne.s32.totalorder %s205, %s208
      %p217 = scmp.eq.s32.totalorder %s32, 1
      %p218 = por %p216, %p217
      %p219 = scmp.ne.s32.totalorder %s208, %s209
      %p220 = scmp.eq.s32.totalorder %s32, 0
      %p221 = por %p219, %p220
      %p222 = scmp.ne.s32.totalorder %s208, %s209
      %p223 = scmp.eq.s32.totalorder %s33, 1
      %p224 = por %p222, %p223
      %p226 = scmp.ne.s32.totalorder %s209, %s225
      %p227 = scmp.eq.s32.totalorder %s33, 0
      %p228 = por %p226, %p227
      %s229 = ssub.s32 %s34, %s46
      %s230 = ssub.s32 %s35, %s42
      %s231 = sor.u32 %s229, %s230
      %p232 = scmp.eq.s32.totalorder %s231, 0
      %s234 = sadd.s32 %s233, 1
      %s235 = scalar_select %p232, %s233, %s234
      %p238 = pneg %p232
      %p239 = scmp.eq.s32.totalorder %s27, 1
      %p240 = por %p238, %p239
      %p241 = scmp.ne.s32.totalorder %s233, %s236
      %p242 = scmp.eq.s32.totalorder %s27, 0
      %p243 = por %p241, %p242
      %p244 = scmp.ne.s32.totalorder %s233, %s236
      %p245 = scmp.eq.s32.totalorder %s32, 1
      %p246 = por %p244, %p245
      %p247 = scmp.ne.s32.totalorder %s236, %s237
      %p248 = scmp.eq.s32.totalorder %s32, 0
      %p249 = por %p247, %p248
      %p250 = scmp.ne.s32.totalorder %s236, %s237
      %p251 = scmp.eq.s32.totalorder %s33, 1
      %p252 = por %p250, %p251
      %p254 = scmp.ne.s32.totalorder %s237, %s253
      %p255 = scmp.eq.s32.totalorder %s33, 0
      %p256 = por %p254, %p255
      %p257 = scmp.le.s32.totalorder 1, %s27
      %p258 = scmp.lt.s32.totalorder %s27, 3
      %p259 = pnand %p257, %p258
      %p260 = pneg %p259
      // Predicated region
      $region9: #{tpu_custom_call.1} parent=5 // pred_check
        _
      $region10: #{tpu_custom_call.1} parent=5 // pred_check_branch
        %262 = sbr.rel (%p259) target = $region12
      $region11: #{tpu_custom_call.1} parent=5 // pred_region
        %s263 = ssub.s32 %s27, 1
        // Predicated region
        $region13: #{tpu_custom_call.1} parent=11 // pred_check
          %p264 = pneg %p88
        $region14: #{tpu_custom_call.1} parent=11 // pred_check_branch
          %266 = sbr.rel (%p264) target = $region16
        $region15: #{tpu_custom_call.1} parent=11 // pred_region
          %s268 = ssub.s32 2048, 2048
          %269 = vsyncadd [#allocation6], %s268
          %s270 = sshll.u32 [#allocation5], 4
          %s271 = int_to_ptr.vmem [resolvable:$true] %s270
          %276 = dma.hbm_to_vmem [thread:$0]  %s1, 2048, %s271, [#allocation6], 64, 64, 4
        $region16: #{tpu_custom_call.1} parent=11 // pred_fallthru
          _
        // Predicated region
        $region17: #{tpu_custom_call.1} parent=11 // pred_check
          %p277 = pneg %p109
        $region18: #{tpu_custom_call.1} parent=11 // pred_check_branch
          %279 = sbr.rel (%p277) target = $region20
        $region19: #{tpu_custom_call.1} parent=11 // pred_region
          %s281 = ssub.s32 16, 16
          %282 = vsyncadd [#allocation6], %s281
          %s284 = sshll.u32 [#allocation7], 4
          %s285 = int_to_ptr.vmem [resolvable:$true] %s284
          %287 = dma.hbm_to_vmem [thread:$0]  %s2, 16, %s285, [#allocation6]
        $region20: #{tpu_custom_call.1} parent=11 // pred_fallthru
          _
        // Predicated region
        $region21: #{tpu_custom_call.1} parent=11 // pred_check
          %p288 = pneg %p130
        $region22: #{tpu_custom_call.1} parent=11 // pred_check_branch
          %290 = sbr.rel (%p288) target = $region24
        $region23: #{tpu_custom_call.1} parent=11 // pred_region
          %s292 = ssub.s32 16, 16
          %293 = vsyncadd [#allocation9], %s292
          %s295 = sshll.u32 [#allocation8], 4
          %s296 = int_to_ptr.vmem [resolvable:$true] %s295
          %298 = dma.hbm_to_vmem [thread:$0]  %s3, 16, %s296, [#allocation9]
        $region24: #{tpu_custom_call.1} parent=11 // pred_fallthru
          _
        // Predicated region
        $region25: #{tpu_custom_call.1} parent=11 // pred_check
          %p299 = pneg %p151
        $region26: #{tpu_custom_call.1} parent=11 // pred_check_branch
          %301 = sbr.rel (%p299) target = $region28
        $region27: #{tpu_custom_call.1} parent=11 // pred_region
          %s303 = ssub.s32 16, 16
          %304 = vsyncadd [#allocation9], %s303
          %s306 = sshll.u32 [#allocation10], 4
          %s307 = int_to_ptr.vmem [resolvable:$true] %s306
          %309 = dma.hbm_to_vmem [thread:$0]  %s4, 16, %s307, [#allocation9]
        $region28: #{tpu_custom_call.1} parent=11 // pred_fallthru
          _
        // Predicated region
        $region29: #{tpu_custom_call.1} parent=11 // pred_check
          %p310 = pneg %p172
        $region30: #{tpu_custom_call.1} parent=11 // pred_check_branch
          %312 = sbr.rel (%p310) target = $region32
        $region31: #{tpu_custom_call.1} parent=11 // pred_region
          %s314 = ssub.s32 512, 512
          %315 = vsyncadd [#allocation12], %s314
          %s316 = sshll.u32 [#allocation11], 4
          %s317 = int_to_ptr.vmem [resolvable:$true] %s316
          %322 = dma.hbm_to_vmem [thread:$0]  %s5, 512, %s317, [#allocation12], 64, 64, 4
        $region32: #{tpu_custom_call.1} parent=11 // pred_fallthru
          _
        // Predicated region
        $region33: #{tpu_custom_call.1} parent=11 // pred_check
          %p323 = pneg %p193
        $region34: #{tpu_custom_call.1} parent=11 // pred_check_branch
          %325 = sbr.rel (%p323) target = $region36
        $region35: #{tpu_custom_call.1} parent=11 // pred_region
          %s327 = ssub.s32 16, 16
          %328 = vsyncadd [#allocation12], %s327
          %s330 = sshll.u32 [#allocation13], 4
          %s331 = int_to_ptr.vmem [resolvable:$true] %s330
          %333 = dma.hbm_to_vmem [thread:$0]  %s6, 16, %s331, [#allocation12]
        $region36: #{tpu_custom_call.1} parent=11 // pred_fallthru
          _
      $region12: #{tpu_custom_call.1} parent=5 // pred_fallthru
        _
      %p334 = scmp.lt.s32.totalorder %s27, 2
      // Predicated region
      $region37: #{tpu_custom_call.1} parent=5 // pred_check
        %p335 = pneg %p334
      $region38: #{tpu_custom_call.1} parent=5 // pred_check_branch
        %337 = sbr.rel (%p335) target = $region40
      $region39: #{tpu_custom_call.1} parent=5 // pred_region
        // Predicated region
        $region41: #{tpu_custom_call.1} parent=39 // pred_check
          %p338 = pneg %p61
        $region42: #{tpu_custom_call.1} parent=39 // pred_check_branch
          %340 = sbr.rel (%p338) target = $region44
        $region43: #{tpu_custom_call.1} parent=39 // pred_region
          %s341 = sand.u32 %s51, 1
          %s342 = scalar_lea.sflag [#allocation3], %s341
          %s343 = sand.u32 %s51, 1
          %s344 = smul.addr %s343, 128
          %s345 = scalar_lea.vmem [#allocation2], %s344
          %s346 = smul.u32 8, %s35
          %s348 = ssub.s32 2048, 2048
          %349 = vsyncadd %s342, %s348
          %s350 = smul.addr %s346, 2
          %s351 = smul.addr %s34, 16
          %s352 = sadd.s32 %s350, %s351
          %s353 = smul.addr %s352, 128
          %s354 = scalar_lea.hbm %s0, %s353
          %s355 = sshll.u32 %s345, 4
          %s356 = int_to_ptr.vmem [resolvable:$true] %s355
          %361 = dma.hbm_to_vmem [thread:$0]  %s354, 2048, %s356, %s342, 128, 128, 8
        $region44: #{tpu_custom_call.1} parent=39 // pred_fallthru
          _
      $region40: #{tpu_custom_call.1} parent=5 // pred_fallthru
        _
      %p362 = scmp.le.s32.totalorder 1, %s27
      %p363 = scmp.lt.s32.totalorder %s27, 3
      %p364 = pnand %p362, %p363
      %p365 = pneg %p364
      // Predicated region
      $region45: #{tpu_custom_call.1} parent=5 // pred_check
        _
      $region46: #{tpu_custom_call.1} parent=5 // pred_check_branch
        %367 = sbr.rel (%p364) target = $region48
      $region47: #{tpu_custom_call.1} parent=5 // pred_region
        %s368 = ssub.s32 %s27, 1
        %s369 = sand.u32 %s54, 1
        %s370 = scalar_lea.sflag [#allocation3], %s369
        %s371 = sand.u32 %s54, 1
        %s372 = smul.addr %s371, 128
        %s373 = scalar_lea.vmem [#allocation2], %s372
        // Predicated region
        $region49: #{tpu_custom_call.1} parent=47 // pred_check
          %p374 = pneg %p67
        $region50: #{tpu_custom_call.1} parent=47 // pred_check_branch
          %376 = sbr.rel (%p374) target = $region52
        $region51: #{tpu_custom_call.1} parent=47 // pred_region
          %377 = dma.done %s370, 2048
        $region52: #{tpu_custom_call.1} parent=47 // pred_fallthru
          _
        // Predicated region
        $region53: #{tpu_custom_call.1} parent=47 // pred_check
          %p378 = pneg %p88
        $region54: #{tpu_custom_call.1} parent=47 // pred_check_branch
          %380 = sbr.rel (%p378) target = $region56
        $region55: #{tpu_custom_call.1} parent=47 // pred_region
          %381 = dma.done [#allocation6], 2048
        $region56: #{tpu_custom_call.1} parent=47 // pred_fallthru
          _
        // Predicated region
        $region57: #{tpu_custom_call.1} parent=47 // pred_check
          %p382 = pneg %p109
        $region58: #{tpu_custom_call.1} parent=47 // pred_check_branch
          %384 = sbr.rel (%p382) target = $region60
        $region59: #{tpu_custom_call.1} parent=47 // pred_region
          %385 = dma.done [#allocation6], 16
        $region60: #{tpu_custom_call.1} parent=47 // pred_fallthru
          _
        // Predicated region
        $region61: #{tpu_custom_call.1} parent=47 // pred_check
          %p386 = pneg %p130
        $region62: #{tpu_custom_call.1} parent=47 // pred_check_branch
          %388 = sbr.rel (%p386) target = $region64
        $region63: #{tpu_custom_call.1} parent=47 // pred_region
          %389 = dma.done [#allocation9], 16
        $region64: #{tpu_custom_call.1} parent=47 // pred_fallthru
          _
        // Predicated region
        $region65: #{tpu_custom_call.1} parent=47 // pred_check
          %p390 = pneg %p151
        $region66: #{tpu_custom_call.1} parent=47 // pred_check_branch
          %392 = sbr.rel (%p390) target = $region68
        $region67: #{tpu_custom_call.1} parent=47 // pred_region
          %393 = dma.done [#allocation9], 16
        $region68: #{tpu_custom_call.1} parent=47 // pred_fallthru
          _
        // Predicated region
        $region69: #{tpu_custom_call.1} parent=47 // pred_check
          %p394 = pneg %p172
        $region70: #{tpu_custom_call.1} parent=47 // pred_check_branch
          %396 = sbr.rel (%p394) target = $region72
        $region71: #{tpu_custom_call.1} parent=47 // pred_region
          %397 = dma.done [#allocation12], 512
        $region72: #{tpu_custom_call.1} parent=47 // pred_fallthru
          _
        // Predicated region
        $region73: #{tpu_custom_call.1} parent=47 // pred_check
          %p398 = pneg %p193
        $region74: #{tpu_custom_call.1} parent=47 // pred_check_branch
          %400 = sbr.rel (%p398) target = $region76
        $region75: #{tpu_custom_call.1} parent=47 // pred_region
          %401 = dma.done [#allocation12], 16
        $region76: #{tpu_custom_call.1} parent=47 // pred_fallthru
          _
        %s402 = sand.u32 %s54, 1
        %s403 = scalar_lea.sflag [#allocation3], %s402
        %s404 = sand.u32 %s54, 1
        %s405 = smul.addr %s404, 128
        %s406 = scalar_lea.vmem [#allocation2], %s405
        %p407 = pneg %p67
        %p408 = pneg %p64
        %p409 = pneg %p88
        %p410 = pneg %p85
        %p411 = pneg %p109
        %p412 = pneg %p106
        %p413 = pneg %p130
        %p414 = pneg %p127
        %p415 = pneg %p151
        %p416 = pneg %p148
        %p417 = pneg %p172
        %p418 = pneg %p169
        %p419 = pneg %p193
        %p420 = pneg %p190
        %p421 = pneg %p221
        %p422 = pneg %p218
        %s423 = sand.u32 %s208, 1
        %s424 = scalar_lea.sflag [#allocation4], %s423
        %s425 = sand.u32 %s208, 1
        %s426 = smul.addr %s425, 32
        %s427 = scalar_lea.vmem [#allocation14], %s426
        %p428 = pneg %p249
        %p429 = pneg %p246
        %s430 = sand.u32 %s236, 1
        %s431 = scalar_lea.sflag [#allocation16], %s430
        %s432 = sand.u32 %s236, 1
        %s433 = smul.addr %s432, 32
        %s434 = scalar_lea.vmem [#allocation15], %s433
        %s435 = smul.u32 8, %s37
        %s436 = smul.u32 8, %s37
        %v438 = vld [vmem:[%s373] sm:$0xff]
        %v439 = vld [vmem:[%s373 + $0x10] sm:$0xff]
        %v440 = vld [vmem:[%s373 + $0x20] sm:$0xff]
        %v441 = vld [vmem:[%s373 + $0x30] sm:$0xff]
        %v442 = vld [vmem:[%s373 + $0x40] sm:$0xff]
        %v443 = vld [vmem:[%s373 + $0x50] sm:$0xff]
        %v444 = vld [vmem:[%s373 + $0x60] sm:$0xff]
        %v445 = vld [vmem:[%s373 + $0x70] sm:$0xff]
        %v446 = vpack.c.bf16 %v439, %v438
        %v447 = vpack.c.bf16 %v441, %v440
        %v448 = vpack.c.bf16 %v443, %v442
        %v449 = vpack.c.bf16 %v445, %v444
        %v450 = vld [vmem:[#allocation5] sm:$0xf]
        %v451 = vld [vmem:[#allocation5 + $0x4] sm:$0xf]
        %v452 = vld [vmem:[#allocation5 + $0x8] sm:$0xf]
        %v453 = vld [vmem:[#allocation5 + $0xc] sm:$0xf]
        %v454 = vld [vmem:[#allocation5 + $0x10] sm:$0xf]
        %v455 = vld [vmem:[#allocation5 + $0x14] sm:$0xf]
        %v456 = vld [vmem:[#allocation5 + $0x18] sm:$0xf]
        %v457 = vld [vmem:[#allocation5 + $0x1c] sm:$0xf]
        %v458 = vld [vmem:[#allocation5 + $0x20] sm:$0xf]
        %v459 = vld [vmem:[#allocation5 + $0x24] sm:$0xf]
        %v460 = vld [vmem:[#allocation5 + $0x28] sm:$0xf]
        %v461 = vld [vmem:[#allocation5 + $0x2c] sm:$0xf]
        %v462 = vld [vmem:[#allocation5 + $0x30] sm:$0xf]
        %v463 = vld [vmem:[#allocation5 + $0x34] sm:$0xf]
        %v464 = vld [vmem:[#allocation5 + $0x38] sm:$0xf]
        %v465 = vld [vmem:[#allocation5 + $0x3c] sm:$0xf]
        %s466 = scalar_lea.vmem %s373, 8 [#allocation2]
        %v467 = vld [vmem:[%s466] sm:$0xff]
        %v468 = vld [vmem:[%s466 + $0x10] sm:$0xff]
        %v469 = vld [vmem:[%s466 + $0x20] sm:$0xff]
        %v470 = vld [vmem:[%s466 + $0x30] sm:$0xff]
        %v471 = vld [vmem:[%s466 + $0x40] sm:$0xff]
        %v472 = vld [vmem:[%s466 + $0x50] sm:$0xff]
        %v473 = vld [vmem:[%s466 + $0x60] sm:$0xff]
        %v474 = vld [vmem:[%s466 + $0x70] sm:$0xff]
        %v475 = vpack.c.bf16 %v468, %v467
        %v476 = vpack.c.bf16 %v470, %v469
        %v477 = vpack.c.bf16 %v472, %v471
        %v478 = vpack.c.bf16 %v474, %v473
        %s479 = scalar_lea.vmem [#allocation5], 64
        %v480 = vld [vmem:[%s479] sm:$0xf]
        %v481 = vld [vmem:[%s479 + $0x4] sm:$0xf]
        %v482 = vld [vmem:[%s479 + $0x8] sm:$0xf]
        %v483 = vld [vmem:[%s479 + $0xc] sm:$0xf]
        %v484 = vld [vmem:[%s479 + $0x10] sm:$0xf]
        %v485 = vld [vmem:[%s479 + $0x14] sm:$0xf]
        %v486 = vld [vmem:[%s479 + $0x18] sm:$0xf]
        %v487 = vld [vmem:[%s479 + $0x1c] sm:$0xf]
        %v488 = vld [vmem:[%s479 + $0x20] sm:$0xf]
        %v489 = vld [vmem:[%s479 + $0x24] sm:$0xf]
        %v490 = vld [vmem:[%s479 + $0x28] sm:$0xf]
        %v491 = vld [vmem:[%s479 + $0x2c] sm:$0xf]
        %v492 = vld [vmem:[%s479 + $0x30] sm:$0xf]
        %v493 = vld [vmem:[%s479 + $0x34] sm:$0xf]
        %v494 = vld [vmem:[%s479 + $0x38] sm:$0xf]
        %v495 = vld [vmem:[%s479 + $0x3c] sm:$0xf]
        %v512 = vunpack.c.l.b16 %v480
        %v513 = vunpack.c.l.b16 %v481
        %v514 = vunpack.c.l.b16 %v482
        %v515 = vunpack.c.l.b16 %v483
        %v516 = vunpack.c.l.b16 %v484
        %v517 = vunpack.c.l.b16 %v485
        %v518 = vunpack.c.l.b16 %v486
        %v519 = vunpack.c.l.b16 %v487
        %v520 = vunpack.c.l.b16 %v488
        %v521 = vunpack.c.l.b16 %v489
        %v522 = vunpack.c.l.b16 %v490
        %v523 = vunpack.c.l.b16 %v491
        %v524 = vunpack.c.l.b16 %v492
        %v525 = vunpack.c.l.b16 %v493
        %v526 = vunpack.c.l.b16 %v494
        %v527 = vunpack.c.l.b16 %v495
        %v528 = vpack.c.b16 %v513, %v512
        %v529 = vpack.c.b16 %v515, %v514
        %v530 = vpack.c.b16 %v517, %v516
        %v531 = vpack.c.b16 %v519, %v518
        %v532 = vpack.c.b16 %v521, %v520
        %v533 = vpack.c.b16 %v523, %v522
        %v534 = vpack.c.b16 %v525, %v524
        %v535 = vpack.c.b16 %v527, %v526
        %544 = vmatprep.subr.bf16.mxu0 0
        %545 = vmatpush1.bf16.msra.mxu0 %v528
        %546 = vmatprep.subr.bf16.mxu0 0
        %547 = vmatpush1.bf16.msra.mxu0 %v529
        %548 = vmatprep.subr.bf16.mxu0 0
        %549 = vmatpush1.bf16.msra.mxu0 %v530
        %550 = vmatprep.subr.bf16.mxu0 0
        %551 = vmatpush1.bf16.msra.mxu0 %v531
        %552 = vmatprep.subr.bf16.mxu0 0
        %553 = vmatpush1.bf16.msra.mxu0 %v532
        %554 = vmatprep.subr.bf16.mxu0 0
        %555 = vmatpush1.bf16.msra.mxu0 %v533
        %556 = vmatprep.subr.bf16.mxu0 0
        %557 = vmatpush1.bf16.msra.mxu0 %v534
        %558 = vmatprep.subr.bf16.mxu0 0
        %559 = vmatpush1.bf16.msra.mxu0 %v535
        %560 = vmatprep.subr.bf16.mxu0 0
        %561 = vmatpush1.bf16.msra.mxu0 0
        %562 = vmatprep.subr.bf16.mxu0 0
        %563 = vmatpush1.bf16.msra.mxu0 0
        %564 = vmatprep.subr.bf16.mxu0 0
        %565 = vmatpush1.bf16.msra.mxu0 0
        %566 = vmatprep.subr.bf16.mxu0 0
        %567 = vmatpush1.bf16.msra.mxu0 0
        %568 = vmatprep.subr.bf16.mxu0 0
        %569 = vmatpush1.bf16.msra.mxu0 0
        %570 = vmatprep.subr.bf16.mxu0 0
        %571 = vmatpush1.bf16.msra.mxu0 0
        %572 = vmatprep.subr.bf16.mxu0 0
        %573 = vmatpush1.bf16.msra.mxu0 0
        %574 = vmatprep.subr.bf16.mxu0 0
        %575 = vmatpush1.bf16.msra.mxu0 0
        %576 = vmatprep.mubr.bf16.mxu0 0
        %577 = vmatmul.mubr.bf16.gmra.mrb[0].mxu0 %v475
        %v578 = vpop.f32.mrb[0].mxu0
        %v579 = vadd.f32 0.0, %v578
        %v580 = vpop.f32.mrb[0].mxu0
        %v581 = vpop.f32.mrb[0].mxu0
        %v582 = vadd.f32 0.0, %v581
        %v583 = vpop.f32.mrb[0].mxu0
        %584 = vmatprep.mubr.bf16.mxu0 0
        %585 = vmatmul.mubr.bf16.gmra.mrb[0].mxu0 %v476
        %v586 = vpop.f32.mrb[0].mxu0
        %v587 = vadd.f32 0.0, %v586
        %v588 = vpop.f32.mrb[0].mxu0
        %v589 = vpop.f32.mrb[0].mxu0
        %v590 = vadd.f32 0.0, %v589
        %v591 = vpop.f32.mrb[0].mxu0
        %592 = vmatprep.mubr.bf16.mxu0 0
        %593 = vmatmul.mubr.bf16.gmra.mrb[0].mxu0 %v477
        %v594 = vpop.f32.mrb[0].mxu0
        %v595 = vadd.f32 0.0, %v594
        %v596 = vpop.f32.mrb[0].mxu0
        %v597 = vpop.f32.mrb[0].mxu0
        %v598 = vadd.f32 0.0, %v597
        %v599 = vpop.f32.mrb[0].mxu0
        %600 = vmatprep.mubr.bf16.mxu0 0
        %601 = vmatmul.mubr.bf16.gmra.mrb[0].mxu0 %v478
        %v602 = vpop.f32.mrb[0].mxu0
        %v603 = vadd.f32 0.0, %v602
        %v604 = vpop.f32.mrb[0].mxu0
        %v605 = vpop.f32.mrb[0].mxu0
        %v606 = vadd.f32 0.0, %v605
        %v607 = vpop.f32.mrb[0].mxu0
        %608 = vdwg.mxu0
        %v625 = vunpack.c.l.b16 %v450
        %v626 = vunpack.c.l.b16 %v451
        %v627 = vunpack.c.l.b16 %v452
        %v628 = vunpack.c.l.b16 %v453
        %v629 = vunpack.c.l.b16 %v454
        %v630 = vunpack.c.l.b16 %v455
        %v631 = vunpack.c.l.b16 %v456
        %v632 = vunpack.c.l.b16 %v457
        %v633 = vunpack.c.l.b16 %v458
        %v634 = vunpack.c.l.b16 %v459
        %v635 = vunpack.c.l.b16 %v460
        %v636 = vunpack.c.l.b16 %v461
        %v637 = vunpack.c.l.b16 %v462
        %v638 = vunpack.c.l.b16 %v463
        %v639 = vunpack.c.l.b16 %v464
        %v640 = vunpack.c.l.b16 %v465
        %v641 = vpack.c.b16 %v626, %v625
        %v642 = vpack.c.b16 %v628, %v627
        %v643 = vpack.c.b16 %v630, %v629
        %v644 = vpack.c.b16 %v632, %v631
        %v645 = vpack.c.b16 %v634, %v633
        %v646 = vpack.c.b16 %v636, %v635
        %v647 = vpack.c.b16 %v638, %v637
        %v648 = vpack.c.b16 %v640, %v639
        %657 = vmatprep.subr.bf16.mxu0 0
        %658 = vmatpush1.bf16.msra.mxu0 %v641
        %659 = vmatprep.subr.bf16.mxu0 0
        %660 = vmatpush1.bf16.msra.mxu0 %v642
        %661 = vmatprep.subr.bf16.mxu0 0
        %662 = vmatpush1.bf16.msra.mxu0 %v643
        %663 = vmatprep.subr.bf16.mxu0 0
        %664 = vmatpush1.bf16.msra.mxu0 %v644
        %665 = vmatprep.subr.bf16.mxu0 0
        %666 = vmatpush1.bf16.msra.mxu0 %v645
        %667 = vmatprep.subr.bf16.mxu0 0
        %668 = vmatpush1.bf16.msra.mxu0 %v646
        %669 = vmatprep.subr.bf16.mxu0 0
        %670 = vmatpush1.bf16.msra.mxu0 %v647
        %671 = vmatprep.subr.bf16.mxu0 0
        %672 = vmatpush1.bf16.msra.mxu0 %v648
        %673 = vmatprep.subr.bf16.mxu0 0
        %674 = vmatpush1.bf16.msra.mxu0 0
        %675 = vmatprep.subr.bf16.mxu0 0
        %676 = vmatpush1.bf16.msra.mxu0 0
        %677 = vmatprep.subr.bf16.mxu0 0
        %678 = vmatpush1.bf16.msra.mxu0 0
        %679 = vmatprep.subr.bf16.mxu0 0
        %680 = vmatpush1.bf16.msra.mxu0 0
        %681 = vmatprep.subr.bf16.mxu0 0
        %682 = vmatpush1.bf16.msra.mxu0 0
        %683 = vmatprep.subr.bf16.mxu0 0
        %684 = vmatpush1.bf16.msra.mxu0 0
        %685 = vmatprep.subr.bf16.mxu0 0
        %686 = vmatpush1.bf16.msra.mxu0 0
        %687 = vmatprep.subr.bf16.mxu0 0
        %688 = vmatpush1.bf16.msra.mxu0 0
        %689 = vmatprep.mubr.bf16.mxu0 0
        %690 = vmatmul.mubr.bf16.gmra.mrb[0].mxu0 %v446
        %v691 = vpop.f32.mrb[0].mxu0
        %v692 = vadd.f32 %v579, %v691
        %v693 = vpop.f32.mrb[0].mxu0
        %v694 = vpop.f32.mrb[0].mxu0
        %v695 = vadd.f32 %v582, %v694
        %v696 = vpop.f32.mrb[0].mxu0
        %697 = vmatprep.mubr.bf16.mxu0 0
        %698 = vmatmul.mubr.bf16.gmra.mrb[0].mxu0 %v447
        %v699 = vpop.f32.mrb[0].mxu0
        %v700 = vadd.f32 %v587, %v699
        %v701 = vpop.f32.mrb[0].mxu0
        %v702 = vpop.f32.mrb[0].mxu0
        %v703 = vadd.f32 %v590, %v702
        %v704 = vpop.f32.mrb[0].mxu0
        %705 = vmatprep.mubr.bf16.mxu0 0
        %706 = vmatmul.mubr.bf16.gmra.mrb[0].mxu0 %v448
        %v707 = vpop.f32.mrb[0].mxu0
        %v708 = vadd.f32 %v595, %v707
        %v709 = vpop.f32.mrb[0].mxu0
        %v710 = vpop.f32.mrb[0].mxu0
        %v711 = vadd.f32 %v598, %v710
        %v712 = vpop.f32.mrb[0].mxu0
        %713 = vmatprep.mubr.bf16.mxu0 0
        %714 = vmatmul.mubr.bf16.gmra.mrb[0].mxu0 %v449
        %v715 = vpop.f32.mrb[0].mxu0
        %v716 = vadd.f32 %v603, %v715
        %v717 = vpop.f32.mrb[0].mxu0
        %v718 = vpop.f32.mrb[0].mxu0
        %v719 = vadd.f32 %v606, %v718
        %v720 = vpop.f32.mrb[0].mxu0
        %721 = vdwg.mxu0
        %v722 = vld [vmem:[#allocation7] sm:$0x1]
        %v724 = vlaneseq
        %v725 = vshrl.u32 %v724, 7
        %v726 = vsub.s32 0, %v725
        %v727 = vrot.slane %v722, %v726
        %v729 = vadd.f32 %v692, %v727
        %v730 = vadd.f32 %v695, %v727
        %v731 = vadd.f32 %v700, %v727
        %v732 = vadd.f32 %v703, %v727
        %v733 = vadd.f32 %v708, %v727
        %v734 = vadd.f32 %v711, %v727
        %v735 = vadd.f32 %v716, %v727
        %v736 = vadd.f32 %v719, %v727
        %vm737 = vcmask 523264
        %v738 = vsel %vm737, %v729, 0.0
        %739 = vadd.xlane.f32.xlu0 %v738
        %v740 = vpop.xlane.xlu0 %739
        %v741 = vsel %vm737, %v730, 0.0
        %742 = vadd.xlane.f32.xlu0 %v741
        %v743 = vpop.xlane.xlu0 %742
        %v744 = vsel %vm737, %v731, 0.0
        %745 = vadd.xlane.f32.xlu0 %v744
        %v746 = vpop.xlane.xlu0 %745
        %v747 = vsel %vm737, %v732, 0.0
        %748 = vadd.xlane.f32.xlu0 %v747
        %v749 = vpop.xlane.xlu0 %748
        %v750 = vsel %vm737, %v733, 0.0
        %751 = vadd.xlane.f32.xlu0 %v750
        %v752 = vpop.xlane.xlu0 %751
        %v753 = vsel %vm737, %v734, 0.0
        %754 = vadd.xlane.f32.xlu0 %v753
        %v755 = vpop.xlane.xlu0 %754
        %v756 = vsel %vm737, %v735, 0.0
        %757 = vadd.xlane.f32.xlu0 %v756
        %v758 = vpop.xlane.xlu0 %757
        %v759 = vsel %vm737, %v736, 0.0
        %760 = vadd.xlane.f32.xlu0 %v759
        %v761 = vpop.xlane.xlu0 %760
        %v762 = vrcp.pop 64.0
        %v763 = vmul.f32 %v740, %v762
        %v764 = vmul.f32 %v743, %v762
        %v765 = vmul.f32 %v746, %v762
        %v766 = vmul.f32 %v749, %v762
        %v767 = vmul.f32 %v752, %v762
        %v768 = vmul.f32 %v755, %v762
        %v769 = vmul.f32 %v758, %v762
        %v770 = vmul.f32 %v761, %v762
        %v771 = vsub.f32 %v729, %v763
        %v772 = vsub.f32 %v730, %v764
        %v773 = vsub.f32 %v731, %v765
        %v774 = vsub.f32 %v732, %v766
        %v775 = vsub.f32 %v733, %v767
        %v776 = vsub.f32 %v734, %v768
        %v777 = vsub.f32 %v735, %v769
        %v778 = vsub.f32 %v736, %v770
        %v779 = vmul.f32 %v771, %v771
        %v780 = vmul.f32 %v772, %v772
        %v781 = vmul.f32 %v773, %v773
        %v782 = vmul.f32 %v774, %v774
        %v783 = vmul.f32 %v775, %v775
        %v784 = vmul.f32 %v776, %v776
        %v785 = vmul.f32 %v777, %v777
        %v786 = vmul.f32 %v778, %v778
        %v787 = vsel %vm737, %v779, 0.0
        %788 = vadd.xlane.f32.xlu0 %v787
        %v789 = vpop.xlane.xlu0 %788
        %v790 = vsel %vm737, %v780, 0.0
        %791 = vadd.xlane.f32.xlu0 %v790
        %v792 = vpop.xlane.xlu0 %791
        %v793 = vsel %vm737, %v781, 0.0
        %794 = vadd.xlane.f32.xlu0 %v793
        %v795 = vpop.xlane.xlu0 %794
        %v796 = vsel %vm737, %v782, 0.0
        %797 = vadd.xlane.f32.xlu0 %v796
        %v798 = vpop.xlane.xlu0 %797
        %v799 = vsel %vm737, %v783, 0.0
        %800 = vadd.xlane.f32.xlu0 %v799
        %v801 = vpop.xlane.xlu0 %800
        %v802 = vsel %vm737, %v784, 0.0
        %803 = vadd.xlane.f32.xlu0 %v802
        %v804 = vpop.xlane.xlu0 %803
        %v805 = vsel %vm737, %v785, 0.0
        %806 = vadd.xlane.f32.xlu0 %v805
        %v807 = vpop.xlane.xlu0 %806
        %v808 = vsel %vm737, %v786, 0.0
        %809 = vadd.xlane.f32.xlu0 %v808
        %v810 = vpop.xlane.xlu0 %809
        %v811 = vmul.f32 %v789, %v762
        %v812 = vmul.f32 %v792, %v762
        %v813 = vmul.f32 %v795, %v762
        %v814 = vmul.f32 %v798, %v762
        %v815 = vmul.f32 %v801, %v762
        %v816 = vmul.f32 %v804, %v762
        %v817 = vmul.f32 %v807, %v762
        %v818 = vmul.f32 %v810, %v762
        %v819 = vadd.f32 %v811, 1e-05
        %v820 = vadd.f32 %v812, 1e-05
        %v821 = vadd.f32 %v813, 1e-05
        %v822 = vadd.f32 %v814, 1e-05
        %v823 = vadd.f32 %v815, 1e-05
        %v824 = vadd.f32 %v816, 1e-05
        %v825 = vadd.f32 %v817, 1e-05
        %v826 = vadd.f32 %v818, 1e-05
        %v827 = vrsqrt.pop %v819
        %v828 = vrsqrt.pop %v820
        %v829 = vrsqrt.pop %v821
        %v830 = vrsqrt.pop %v822
        %v831 = vrsqrt.pop %v823
        %v832 = vrsqrt.pop %v824
        %v833 = vrsqrt.pop %v825
        %v834 = vrsqrt.pop %v826
        %v835 = vmul.f32 %v771, %v827
        %v836 = vmul.f32 %v772, %v828
        %v837 = vmul.f32 %v773, %v829
        %v838 = vmul.f32 %v774, %v830
        %v839 = vmul.f32 %v775, %v831
        %v840 = vmul.f32 %v776, %v832
        %v841 = vmul.f32 %v777, %v833
        %v842 = vmul.f32 %v778, %v834
        %v843 = vld [vmem:[#allocation8] sm:$0x1]
        %v845 = vlaneseq
        %v846 = vshrl.u32 %v845, 7
        %v847 = vsub.s32 0, %v846
        %v848 = vrot.slane %v843, %v847
        %v850 = vmul.f32 %v835, %v848
        %v851 = vmul.f32 %v836, %v848
        %v852 = vmul.f32 %v837, %v848
        %v853 = vmul.f32 %v838, %v848
        %v854 = vmul.f32 %v839, %v848
        %v855 = vmul.f32 %v840, %v848
        %v856 = vmul.f32 %v841, %v848
        %v857 = vmul.f32 %v842, %v848
        %v858 = vld [vmem:[#allocation10] sm:$0x1]
        %v860 = vlaneseq
        %v861 = vshrl.u32 %v860, 7
        %v862 = vsub.s32 0, %v861
        %v863 = vrot.slane %v858, %v862
        %v865 = vadd.f32 %v850, %v863
        %v866 = vadd.f32 %v851, %v863
        %v867 = vadd.f32 %v852, %v863
        %v868 = vadd.f32 %v853, %v863
        %v869 = vadd.f32 %v854, %v863
        %v870 = vadd.f32 %v855, %v863
        %v871 = vadd.f32 %v856, %v863
        %v872 = vadd.f32 %v857, %v863
        %v873 = vpack.c.bf16 %v866, %v865
        %v874 = vpack.c.bf16 %v868, %v867
        %v875 = vpack.c.bf16 %v870, %v869
        %v876 = vpack.c.bf16 %v872, %v871
        %v877 = vld [vmem:[#allocation11] sm:$0xf]
        %v878 = vld [vmem:[#allocation11 + $0x4] sm:$0xf]
        %v879 = vld [vmem:[#allocation11 + $0x8] sm:$0xf]
        %v880 = vld [vmem:[#allocation11 + $0xc] sm:$0xf]
        %v881 = vld [vmem:[#allocation11 + $0x10] sm:$0xf]
        %v882 = vld [vmem:[#allocation11 + $0x14] sm:$0xf]
        %v883 = vld [vmem:[#allocation11 + $0x18] sm:$0xf]
        %v884 = vld [vmem:[#allocation11 + $0x1c] sm:$0xf]
        %v885 = vld [vmem:[#allocation13] sm:$0x1]
        %v887 = vlaneseq
        %v888 = vshrl.u32 %v887, 7
        %v889 = vsub.s32 0, %v888
        %v890 = vrot.slane %v885, %v889
        %v900 = vunpack.c.l.b16 %v877
        %v901 = vunpack.c.l.b16 %v878
        %v902 = vunpack.c.l.b16 %v879
        %v903 = vunpack.c.l.b16 %v880
        %v904 = vunpack.c.l.b16 %v881
        %v905 = vunpack.c.l.b16 %v882
        %v906 = vunpack.c.l.b16 %v883
        %v907 = vunpack.c.l.b16 %v884
        %v908 = vpack.c.b16 %v901, %v900
        %v909 = vpack.c.b16 %v903, %v902
        %v910 = vpack.c.b16 %v905, %v904
        %v911 = vpack.c.b16 %v907, %v906
        %v917 = vsel %vm737, %v873, 0
        %v920 = vsel %vm737, %v874, 0
        %v923 = vsel %vm737, %v875, 0
        %v926 = vsel %vm737, %v876, 0
        %928 = vmatprep.subr.bf16.mxu0 0
        %929 = vmatpush1.bf16.msra.mxu0 %v908
        %930 = vmatprep.subr.bf16.mxu0 0
        %931 = vmatpush1.bf16.msra.mxu0 %v909
        %932 = vmatprep.subr.bf16.mxu0 0
        %933 = vmatpush1.bf16.msra.mxu0 %v910
        %934 = vmatprep.subr.bf16.mxu0 0
        %935 = vmatpush1.bf16.msra.mxu0 %v911
        %936 = vmatprep.subr.bf16.mxu0 0
        %937 = vmatpush1.bf16.msra.mxu0 0
        %938 = vmatprep.subr.bf16.mxu0 0
        %939 = vmatpush1.bf16.msra.mxu0 0
        %940 = vmatprep.subr.bf16.mxu0 0
        %941 = vmatpush1.bf16.msra.mxu0 0
        %942 = vmatprep.subr.bf16.mxu0 0
        %943 = vmatpush1.bf16.msra.mxu0 0
        %944 = vmatprep.subr.bf16.mxu0 0
        %945 = vmatpush1.bf16.msra.mxu0 0
        %946 = vmatprep.subr.bf16.mxu0 0
        %947 = vmatpush1.bf16.msra.mxu0 0
        %948 = vmatprep.subr.bf16.mxu0 0
        %949 = vmatpush1.bf16.msra.mxu0 0
        %950 = vmatprep.subr.bf16.mxu0 0
        %951 = vmatpush1.bf16.msra.mxu0 0
        %952 = vmatprep.subr.bf16.mxu0 0
        %953 = vmatpush1.bf16.msra.mxu0 0
        %954 = vmatprep.subr.bf16.mxu0 0
        %955 = vmatpush1.bf16.msra.mxu0 0
        %956 = vmatprep.subr.bf16.mxu0 0
        %957 = vmatpush1.bf16.msra.mxu0 0
        %958 = vmatprep.subr.bf16.mxu0 0
        %959 = vmatpush1.bf16.msra.mxu0 0
        %960 = vmatprep.mubr.bf16.mxu0 0
        %961 = vmatmul.mubr.bf16.gmra.mrb[0].mxu0 %v917
        %v962 = vpop.f32.mrb[0].mxu0
        %v963 = vadd.f32 %v890, %v962
        %v964 = vpop.f32.mrb[0].mxu0
        %v965 = vpop.f32.mrb[0].mxu0
        %v966 = vadd.f32 %v890, %v965
        %v967 = vpop.f32.mrb[0].mxu0
        %968 = vmatprep.mubr.bf16.mxu0 0
        %969 = vmatmul.mubr.bf16.gmra.mrb[0].mxu0 %v920
        %v970 = vpop.f32.mrb[0].mxu0
        %v971 = vadd.f32 %v890, %v970
        %v972 = vpop.f32.mrb[0].mxu0
        %v973 = vpop.f32.mrb[0].mxu0
        %v974 = vadd.f32 %v890, %v973
        %v975 = vpop.f32.mrb[0].mxu0
        %976 = vmatprep.mubr.bf16.mxu0 0
        %977 = vmatmul.mubr.bf16.gmra.mrb[0].mxu0 %v923
        %v978 = vpop.f32.mrb[0].mxu0
        %v979 = vadd.f32 %v890, %v978
        %v980 = vpop.f32.mrb[0].mxu0
        %v981 = vpop.f32.mrb[0].mxu0
        %v982 = vadd.f32 %v890, %v981
        %v983 = vpop.f32.mrb[0].mxu0
        %984 = vmatprep.mubr.bf16.mxu0 0
        %985 = vmatmul.mubr.bf16.gmra.mrb[0].mxu0 %v926
        %v986 = vpop.f32.mrb[0].mxu0
        %v987 = vadd.f32 %v890, %v986
        %v988 = vpop.f32.mrb[0].mxu0
        %v989 = vpop.f32.mrb[0].mxu0
        %v990 = vadd.f32 %v890, %v989
        %v991 = vpop.f32.mrb[0].mxu0
        %992 = vdwg.mxu0
        %993 = vxpose.xlu0.b32.start [1/16] %v963, 128
        %994 = vxpose.xlu0.b32.cont [2/16] %v966, 128
        %995 = vxpose.xlu0.b32.cont [3/16] %v971, 128
        %996 = vxpose.xlu0.b32.cont [4/16] %v974, 128
        %997 = vxpose.xlu0.b32.cont [5/16] %v979, 128
        %998 = vxpose.xlu0.b32.cont [6/16] %v982, 128
        %999 = vxpose.xlu0.b32.cont [7/16] %v987, 128
        %1000 = vxpose.xlu0.b32.cont [8/16] %v990, 128
        %1001 = vxpose.xlu0.b32.cont [9/16] 0.0, 128
        %1002 = vxpose.xlu0.b32.cont [10/16] 0.0, 128
        %1003 = vxpose.xlu0.b32.cont [11/16] 0.0, 128
        %1004 = vxpose.xlu0.b32.cont [12/16] 0.0, 128
        %1005 = vxpose.xlu0.b32.cont [13/16] 0.0, 128
        %1006 = vxpose.xlu0.b32.cont [14/16] 0.0, 128
        %1007 = vxpose.xlu0.b32.cont [15/16] 0.0, 128
        %1008 = vxpose.xlu0.b32.end [16/16] 0.0, 128
        %v1009 = vpop.trf.xlu0
        %v1010 = vpop.trf.xlu0
        %v1011 = vpop.trf.xlu0
        %v1012 = vpop.trf.xlu0
        %v1013 = vpop.trf.xlu0
        %v1014 = vpop.trf.xlu0
        %v1015 = vpop.trf.xlu0
        %v1016 = vpop.trf.xlu0
        %v1017 = vpop.trf.xlu0
        %v1018 = vpop.trf.xlu0
        %v1019 = vpop.trf.xlu0
        %v1020 = vpop.trf.xlu0
        %v1021 = vpop.trf.xlu0
        %v1022 = vpop.trf.xlu0
        %v1023 = vpop.trf.xlu0
        %v1024 = vpop.trf.xlu0
        %v1025 = vpack.c.bf16 %v1010, %v1009
        %v1026 = vpack.c.bf16 %v1012, %v1011
        %v1027 = vpack.c.bf16 %v1014, %v1013
        %v1028 = vpack.c.bf16 %v1016, %v1015
        %v1033 = vunpack.c.l.b16 %v1025
        %v1034 = vunpack.c.h.b16 %v1025
        %v1035 = vunpack.c.l.b16 %v1026
        %v1036 = vunpack.c.h.b16 %v1026
        %v1037 = vunpack.c.l.b16 %v1027
        %v1038 = vunpack.c.h.b16 %v1027
        %v1039 = vunpack.c.l.b16 %v1028
        %v1040 = vunpack.c.h.b16 %v1028
        %v1041 = vpack.c.b16 %v1033, %v1033
        %v1042 = vpack.c.b16 %v1034, %v1034
        %v1043 = vpack.c.b16 %v1035, %v1035
        %v1044 = vpack.c.b16 %v1036, %v1036
        %v1045 = vpack.c.b16 %v1037, %v1037
        %v1046 = vpack.c.b16 %v1038, %v1038
        %v1047 = vpack.c.b16 %v1039, %v1039
        %v1048 = vpack.c.b16 %v1040, %v1040
        %vm1057 = vcmask 519168
        %1058 = vst.msk [vmem:[%s427] sm:$0xf] %vm1057, %v1041
        %1059 = vst.msk [vmem:[%s427 + $0x4] sm:$0xf] %vm1057, %v1042
        %1060 = vst.msk [vmem:[%s427 + $0x8] sm:$0xf] %vm1057, %v1043
        %1061 = vst.msk [vmem:[%s427 + $0xc] sm:$0xf] %vm1057, %v1044
        %1062 = vst.msk [vmem:[%s427 + $0x10] sm:$0xf] %vm1057, %v1045
        %1063 = vst.msk [vmem:[%s427 + $0x14] sm:$0xf] %vm1057, %v1046
        %1064 = vst.msk [vmem:[%s427 + $0x18] sm:$0xf] %vm1057, %v1047
        %1065 = vst.msk [vmem:[%s427 + $0x1c] sm:$0xf] %vm1057, %v1048
        %v1066 = vpack.c.bf16 %v966, %v963
        %v1067 = vpack.c.bf16 %v974, %v971
        %v1068 = vpack.c.bf16 %v982, %v979
        %v1069 = vpack.c.bf16 %v990, %v987
        %v1074 = vunpack.c.l.b16 %v1066
        %v1075 = vunpack.c.h.b16 %v1066
        %v1076 = vunpack.c.l.b16 %v1067
        %v1077 = vunpack.c.h.b16 %v1067
        %v1078 = vunpack.c.l.b16 %v1068
        %v1079 = vunpack.c.h.b16 %v1068
        %v1080 = vunpack.c.l.b16 %v1069
        %v1081 = vunpack.c.h.b16 %v1069
        %v1082 = vpack.c.b16 %v1074, %v1074
        %v1083 = vpack.c.b16 %v1075, %v1075
        %v1084 = vpack.c.b16 %v1076, %v1076
        %v1085 = vpack.c.b16 %v1077, %v1077
        %v1086 = vpack.c.b16 %v1078, %v1078
        %v1087 = vpack.c.b16 %v1079, %v1079
        %v1088 = vpack.c.b16 %v1080, %v1080
        %v1089 = vpack.c.b16 %v1081, %v1081
        %1090 = vrot.lane.b32.xlu0 %v1082, 64
        %v1091 = vpop.permute.xlu0 %1090
        %1092 = vrot.lane.b32.xlu0 %v1083, 64
        %v1093 = vpop.permute.xlu0 %1092
        %1094 = vrot.lane.b32.xlu0 %v1084, 64
        %v1095 = vpop.permute.xlu0 %1094
        %1096 = vrot.lane.b32.xlu0 %v1085, 64
        %v1097 = vpop.permute.xlu0 %1096
        %1098 = vrot.lane.b32.xlu0 %v1086, 64
        %v1099 = vpop.permute.xlu0 %1098
        %1100 = vrot.lane.b32.xlu0 %v1087, 64
        %v1101 = vpop.permute.xlu0 %1100
        %1102 = vrot.lane.b32.xlu0 %v1088, 64
        %v1103 = vpop.permute.xlu0 %1102
        %1104 = vrot.lane.b32.xlu0 %v1089, 64
        %v1105 = vpop.permute.xlu0 %1104
        %1114 = vst.msk [vmem:[%s434] sm:$0xf] %vm1057, %v1091
        %1115 = vst.msk [vmem:[%s434 + $0x4] sm:$0xf] %vm1057, %v1093
        %1116 = vst.msk [vmem:[%s434 + $0x8] sm:$0xf] %vm1057, %v1095
        %1117 = vst.msk [vmem:[%s434 + $0xc] sm:$0xf] %vm1057, %v1097
        %1118 = vst.msk [vmem:[%s434 + $0x10] sm:$0xf] %vm1057, %v1099
        %1119 = vst.msk [vmem:[%s434 + $0x14] sm:$0xf] %vm1057, %v1101
        %1120 = vst.msk [vmem:[%s434 + $0x18] sm:$0xf] %vm1057, %v1103
        %1121 = vst.msk [vmem:[%s434 + $0x1c] sm:$0xf] %vm1057, %v1105
        %s1122 = sand.u32 %s208, 1
        %s1123 = scalar_lea.sflag [#allocation4], %s1122
        %s1124 = sand.u32 %s208, 1
        %s1125 = smul.addr %s1124, 32
        %s1126 = scalar_lea.vmem [#allocation14], %s1125
        %s1127 = sand.u32 %s236, 1
        %s1128 = scalar_lea.sflag [#allocation16], %s1127
        %s1129 = sand.u32 %s236, 1
        %s1130 = smul.addr %s1129, 32
        %s1131 = scalar_lea.vmem [#allocation15], %s1130
        // Predicated region
        $region77: #{tpu_custom_call.1} parent=47 // pred_check
          %p1132 = pneg %p218
        $region78: #{tpu_custom_call.1} parent=47 // pred_check_branch
          %1134 = sbr.rel (%p1132) target = $region80
        $region79: #{tpu_custom_call.1} parent=47 // pred_region
          %s1136 = ssub.s32 512, 512
          %1137 = vsyncadd %s1123, %s1136
          %s1138 = smul.addr %s36, 8
          %s1139 = sadd.s32 %s37, %s1138
          %s1140 = smul.addr %s1139, 64
          %s1141 = scalar_lea.hbm %s7, %s1140
          %s1142 = sshll.u32 %s1126, 4
          %s1143 = int_to_ptr.vmem [resolvable:$true] %s1142
          %1148 = dma.vmem_to_hbm [thread:$0]  %s1143, 512, %s1141, %s1123, 64, 64, 4
        $region80: #{tpu_custom_call.1} parent=47 // pred_fallthru
          _
        // Predicated region
        $region81: #{tpu_custom_call.1} parent=47 // pred_check
          %p1149 = pneg %p246
        $region82: #{tpu_custom_call.1} parent=47 // pred_check_branch
          %1151 = sbr.rel (%p1149) target = $region84
        $region83: #{tpu_custom_call.1} parent=47 // pred_region
          %s1152 = smul.u32 8, %s37
          %s1154 = ssub.s32 512, 512
          %1155 = vsyncadd %s1128, %s1154
          %s1156 = smul.addr %s36, 8
          %s1157 = sadd.s32 %s1152, %s1156
          %s1158 = smul.addr %s1157, 64
          %s1159 = scalar_lea.hbm %s8, %s1158
          %s1160 = sshll.u32 %s1131, 4
          %s1161 = int_to_ptr.vmem [resolvable:$true] %s1160
          %1166 = dma.vmem_to_hbm [thread:$0]  %s1161, 512, %s1159, %s1128, 64, 64, 4
        $region84: #{tpu_custom_call.1} parent=47 // pred_fallthru
          _
      $region48: #{tpu_custom_call.1} parent=5 // pred_fallthru
        _
      %p1167 = scmp.le.s32.totalorder 2, %s27
      // Predicated region
      $region85: #{tpu_custom_call.1} parent=5 // pred_check
        %p1168 = pneg %p1167
      $region86: #{tpu_custom_call.1} parent=5 // pred_check_branch
        %1170 = sbr.rel (%p1168) target = $region88
      $region87: #{tpu_custom_call.1} parent=5 // pred_region
        %s1171 = ssub.s32 %s27, 2
        // Predicated region
        $region89: #{tpu_custom_call.1} parent=87 // pred_check
          %p1172 = pneg %p224
        $region90: #{tpu_custom_call.1} parent=87 // pred_check_branch
          %1174 = sbr.rel (%p1172) target = $region92
        $region91: #{tpu_custom_call.1} parent=87 // pred_region
          %s1175 = sand.u32 %s209, 1
          %s1176 = scalar_lea.sflag [#allocation4], %s1175
          %s1177 = sand.u32 %s209, 1
          %s1178 = smul.addr %s1177, 32
          %s1179 = scalar_lea.vmem [#allocation14], %s1178
          %1180 = dma.done %s1176, 512
        $region92: #{tpu_custom_call.1} parent=87 // pred_fallthru
          _
        // Predicated region
        $region93: #{tpu_custom_call.1} parent=87 // pred_check
          %p1181 = pneg %p252
        $region94: #{tpu_custom_call.1} parent=87 // pred_check_branch
          %1183 = sbr.rel (%p1181) target = $region96
        $region95: #{tpu_custom_call.1} parent=87 // pred_region
          %s1184 = sand.u32 %s237, 1
          %s1185 = scalar_lea.sflag [#allocation16], %s1184
          %s1186 = sand.u32 %s237, 1
          %s1187 = smul.addr %s1186, 32
          %s1188 = scalar_lea.vmem [#allocation15], %s1187
          %1189 = dma.done %s1185, 512
        $region96: #{tpu_custom_call.1} parent=87 // pred_fallthru
          _
      $region88: #{tpu_custom_call.1} parent=5 // pred_fallthru
        _
    $region6: #{tpu_custom_call.1} parent=1 // loop_footer
      %s31 = sadd.s32 1, %s27
    $region7: #{tpu_custom_call.1} parent=1 // loop_footer_branch
      %26 = sbr.rel target = $region3
    $region8: #{tpu_custom_call.1} parent=1 // loop_exit
      _
    %1190 = vsyncpa [#allocation3], 1
    %s1191 = scalar_lea.sflag [#allocation3], 1
    %1192 = vsyncpa %s1191, 1
    %1193 = vsyncpa [#allocation6], 1
    %1194 = vsyncpa [#allocation9], 1
    %1195 = vsyncpa [#allocation12], 1
    %1196 = vsyncpa [#allocation4], 1
    %s1197 = scalar_lea.sflag [#allocation4], 1
    %1198 = vsyncpa %s1197, 1
    %1199 = vsyncpa [#allocation16], 1
    %s1200 = scalar_lea.sflag [#allocation16], 1
    %1201 = vsyncpa %s1200, 1

</llo_original>
